<compile_context>
chip_gen: v7x
topology: tpu7x:2x2x1
jax: 0.10.0
libtpu: 0.0.40
codegen_flags: <defaults>
</compile_context>

<pallas_src>
import jax
import jax.numpy as jnp
from jax.experimental import pallas as pl
from jax.experimental.pallas import tpu as pltpu

GEM_EPS = 1e-6  # GeM eps (module default)


def _silu(x):
    # x * sigmoid(x); exp and approx reciprocal both run on the EUP slot.
    return x * pl.reciprocal(1.0 + jnp.exp(-x), approx=True)


# ---------------------------------------------------------------------------
# Fused Pallas kernel:
#   backbone GEMMs + SiLU -> GeM pool -> feature_linear -> ReLU
#   -> (Dropout = identity in eval) -> last_linear
# ---------------------------------------------------------------------------
def fused_forward_kernel(cols_ref, w_stem_ref, b_stem_ref, w_pw_ref, b_pw_ref,
                         w_feat_ref, b_feat_ref, w_last_ref, b_last_ref,
                         gem_p_ref, out_ref):
    # -- backbone stage 1: 3x3 conv as GEMM over im2col, bias + SiLU (bf16 -> f32) --
    cols = cols_ref[0]                                             # [HW, 9*Cin] bf16
    h1 = jnp.dot(cols, w_stem_ref[...], preferred_element_type=jnp.float32)
    h1 = _silu(h1 + b_stem_ref[...])                               # f32 [HW, C_stem]

    # -- backbone stage 2: 1x1 conv as GEMM, bias + SiLU --
    h2 = jnp.dot(h1.astype(jnp.bfloat16), w_pw_ref[...],
                 preferred_element_type=jnp.float32)
    h2 = _silu(h2 + b_pw_ref[...])                                 # f32 [HW, C_feat]

    # -- GeM pool: (mean_hw clamp(x, eps)^p)^(1/p); x^p as exp(p*log(x)) on the EUP --
    p = gem_p_ref[0]                                               # learnable scalar
    hw = h2.shape[0]
    powed = jnp.exp(p * jnp.log(jnp.maximum(h2, GEM_EPS)))         # f32 [HW, C_feat]
    ones = jnp.ones((1, hw), jnp.float32)
    gem_sum = jnp.dot(ones, powed,
                      preferred_element_type=jnp.float32)          # [1, C_feat] (MXU)
    pooled = jnp.exp(jnp.log(gem_sum * (1.0 / hw)) * (1.0 / p))    # [1, C_feat]

    # -- Flatten (no-op on [1, C]) + feature_linear + ReLU --
    f = jnp.dot(pooled.astype(jnp.bfloat16), w_feat_ref[...],
                preferred_element_type=jnp.float32) + b_feat_ref[...]
    f = jnp.maximum(f, 0.0)                                        # [1, feature_dim]

    # -- Dropout(0.5) == identity in eval; last_linear (padded to 128 output lanes) --
    logits = jnp.dot(f.astype(jnp.bfloat16), w_last_ref[...],
                     preferred_element_type=jnp.float32) + b_last_ref[...]
    out_ref[...] = logits.astype(out_ref.dtype).reshape(out_ref.shape)


def _fused_forward_call(cols, params):
    """cols: [N, HW, 9*Cin] bf16 -> padded logits [N, 1, F_pad] f32."""
    N, HW, K9 = cols.shape
    w_stem, b_stem = params["w_stem"], params["b_stem"]
    w_pw, b_pw = params["w_pw"], params["b_pw"]
    w_feat, b_feat = params["w_feat"], params["b_feat"]
    w_last, b_last = params["w_last"], params["b_last"]
    gem_p = params["gem_p"]
    f_pad = w_last.shape[1]

    def full(shape):  # whole-array block, replicated across the batch grid
        return pl.BlockSpec(shape, lambda b: (0,) * len(shape))

    return pl.pallas_call(
        fused_forward_kernel,
        out_shape=jax.ShapeDtypeStruct((N, 1, f_pad), jnp.float32),
        grid=(N,),
        in_specs=[
            pl.BlockSpec((1, HW, K9), lambda b: (b, 0, 0)),     # one image's pixels
            full(w_stem.shape), full(b_stem.shape),
            full(w_pw.shape), full(b_pw.shape),
            full(w_feat.shape), full(b_feat.shape),
            full(w_last.shape), full(b_last.shape),
            pl.BlockSpec(memory_space=pltpu.MemorySpace.SMEM),  # GeM p (scalar)
        ],
        out_specs=pl.BlockSpec((1, 1, f_pad), lambda b: (b, 0, 0)),
        compiler_params=pltpu.CompilerParams(
            # batch tiles are independent -> shard across v7x's 2 TensorCores
            dimension_semantics=("parallel",),
            # let XLA fuse the im2col pad/concat producer into the cols input
            allow_input_fusion=[True] + [False] * 9,
        ),
    )(cols, w_stem, b_stem, w_pw, b_pw, w_feat, b_feat, w_last, b_last, gem_p)


# ---------------------------------------------------------------------------
# Glue (im2col, parameter setup, full forward)
# ---------------------------------------------------------------------------
def im2col_3x3(x_nhwc):
    """3x3 / stride 1 / pad 1 patch extraction -> [N, H*W, 9*C] in bf16."""
    N, H, W, C = x_nhwc.shape
    xp = jnp.pad(x_nhwc, ((0, 0), (1, 1), (1, 1), (0, 0)))
    patches = [xp[:, dh:dh + H, dw:dw + W, :]
               for dh in range(3) for dw in range(3)]
    cols = jnp.concatenate(patches, axis=-1).reshape(N, H * W, 9 * C)
    # TODO(synk): at real EfficientNet resolutions move im2col in-kernel
    # (shifted-window accumulating dots) so each input pixel is read once.
    return cols.astype(jnp.bfloat16)


def init_params(key, c_in=4, c_stem=32, c_feat=64, feature_dim=128,
                out_features=14, f_pad=128):
    """Synthetic backbone + feature_linear / last_linear + GeM p.

    Linear weights are stored pre-transposed as [in, out] (PyTorch keeps
    [out, in]) and in bf16; last_linear is zero-padded to f_pad output lanes so
    the kernel's only HBM store is lane-dense.  Biases stay f32.
    """
    ks = jax.random.split(key, 8)
    wt = lambda k, s: (jax.random.normal(k, s, jnp.float32) * 0.05).astype(jnp.bfloat16)
    bs = lambda k, s: jax.random.normal(k, s, jnp.float32) * 0.01

    w_last = jax.random.normal(ks[6], (feature_dim, out_features), jnp.float32) * 0.05
    b_last = jax.random.normal(ks[7], (out_features,), jnp.float32) * 0.01
    w_last_pad = jnp.zeros((feature_dim, f_pad), jnp.float32).at[:, :out_features].set(w_last)
    b_last_pad = jnp.zeros((1, f_pad), jnp.float32).at[0, :out_features].set(b_last)

    return {
        # synthetic stand-in for timm efficientnet_b0 .features
        "w_stem": wt(ks[0], (9 * c_in, c_stem)),
        "b_stem": bs(ks[1], (1, c_stem)),
        "w_pw":   wt(ks[2], (c_stem, c_feat)),
        "b_pw":   bs(ks[3], (1, c_feat)),
        # feature_linear: Linear(c_feat -> feature_dim)
        "w_feat": wt(ks[4], (c_feat, feature_dim)),
        "b_feat": bs(ks[5], (1, feature_dim)),
        # last_linear: Linear(feature_dim -> out_features), padded to f_pad lanes
        "w_last": w_last_pad.astype(jnp.bfloat16),
        "b_last": b_last_pad,
        # GeM learnable exponent (torch.ones(1) * 3)
        "gem_p": jnp.full((1,), 3.0, jnp.float32),
    }


def efficinet_net_fn_forward(params, x_nchw, out_features=14):
    """EfficinetNetFN.forward(x, infer=False) in eval mode."""
    # TODO(synk): the infer=True branch (returns GeM-pooled backbone features) is
    # not exposed; only the default classification path is implemented.
    N, C, H, W = x_nchw.shape
    x = jnp.transpose(x_nchw, (0, 2, 3, 1))           # NCHW -> NHWC
    cols = im2col_3x3(x)                              # [N, HW, 9*C] bf16
    logits_pad = _fused_forward_call(cols, params)    # [N, 1, 128]
    return logits_pad.reshape(N, -1)[:, :out_features]


def reference_forward(params, x_nchw, out_features=14):
    """Pure-JAX (non-Pallas) reference of the same forward for correctness check."""
    x = jnp.transpose(x_nchw, (0, 2, 3, 1))
    cols = im2col_3x3(x).astype(jnp.float32)                      # same bf16 input rounding
    h1 = jax.nn.silu(cols @ params["w_stem"].astype(jnp.float32) + params["b_stem"])
    h2 = jax.nn.silu(h1 @ params["w_pw"].astype(jnp.float32) + params["b_pw"])
    p = params["gem_p"][0]
    pooled = jnp.mean(jnp.clip(h2, GEM_EPS, None) ** p, axis=1) ** (1.0 / p)   # GeM
    f = jnp.maximum(pooled @ params["w_feat"].astype(jnp.float32) + params["b_feat"], 0.0)
    logits = f @ params["w_last"].astype(jnp.float32) + params["b_last"]
    return logits[:, :out_features]


# ---------------------------------------------------------------------------
if __name__ == "__main__":
    key = jax.random.PRNGKey(0)
    k_x, k_p = jax.random.split(key)

    # small shapes consistent with the module: batch=2, channels=4, spatial=16
    x = jax.random.normal(k_x, (2, 4, 16, 16), jnp.float32)   # NCHW like PyTorch
    params = init_params(k_p)

    fwd = jax.jit(efficinet_net_fn_forward)
    out = jax.block_until_ready(fwd(params, x))
    assert out.shape == (2, 14), out.shape
    assert bool(jnp.all(jnp.isfinite(out))), "non-finite logits"

    ref = reference_forward(params, x)
    assert bool(jnp.allclose(out, ref, rtol=1e-1, atol=5e-3)), (
        "kernel/reference mismatch: max abs diff = %g" % float(jnp.max(jnp.abs(out - ref))))
    print("KERNEL_OK")
</pallas_src>

<mosaic_0001>
module attributes {stable_mosaic.version = 11 : i64} {
  func.func @fused_forward_kernel(%arg0: i32, %arg1: memref<1x256x36xbf16, #tpu.memory_space<vmem>>, %arg2: memref<36x32xbf16, #tpu.memory_space<vmem>>, %arg3: memref<1x32xf32, #tpu.memory_space<vmem>>, %arg4: memref<32x64xbf16, #tpu.memory_space<vmem>>, %arg5: memref<1x64xf32, #tpu.memory_space<vmem>>, %arg6: memref<64x128xbf16, #tpu.memory_space<vmem>>, %arg7: memref<1x128xf32, #tpu.memory_space<vmem>>, %arg8: memref<128x128xbf16, #tpu.memory_space<vmem>>, %arg9: memref<1x128xf32, #tpu.memory_space<vmem>>, %arg10: memref<1xf32, #tpu.memory_space<smem>>, %arg11: memref<1x1x128xf32, #tpu.memory_space<vmem>>) attributes {dimension_semantics = [#tpu.dimension_semantics<parallel>], iteration_bounds = array<i64: 2>, scalar_prefetch = 0 : i64, scratch_operands = 0 : i64, tpu.core_type = #tpu.core_type<tc>, window_params = [{transform_indices = @transform_0, window_bounds = array<i64: 1, 256, 36>}, {pipeline_mode = #tpu.pipeline_mode<synchronous>, transform_indices = @transform_1, window_bounds = array<i64: 36, 32>}, {pipeline_mode = #tpu.pipeline_mode<synchronous>, transform_indices = @transform_2, window_bounds = array<i64: 1, 32>}, {pipeline_mode = #tpu.pipeline_mode<synchronous>, transform_indices = @transform_3, window_bounds = array<i64: 32, 64>}, {pipeline_mode = #tpu.pipeline_mode<synchronous>, transform_indices = @transform_4, window_bounds = array<i64: 1, 64>}, {pipeline_mode = #tpu.pipeline_mode<synchronous>, transform_indices = @transform_5, window_bounds = array<i64: 64, 128>}, {pipeline_mode = #tpu.pipeline_mode<synchronous>, transform_indices = @transform_6, window_bounds = array<i64: 1, 128>}, {pipeline_mode = #tpu.pipeline_mode<synchronous>, transform_indices = @transform_7, window_bounds = array<i64: 128, 128>}, {pipeline_mode = #tpu.pipeline_mode<synchronous>, transform_indices = @transform_8, window_bounds = array<i64: 1, 128>}, {transform_indices = @transform_9, window_bounds = array<i64: 1>}, {transform_indices = @transform_10, window_bounds = array<i64: 1, 1, 128>}]} {
    %c0 = arith.constant 0 : index
    %c0_0 = arith.constant 0 : index
    %c0_1 = arith.constant 0 : index
    %0 = vector.load %arg1[%c0, %c0_0, %c0_1] : memref<1x256x36xbf16, #tpu.memory_space<vmem>>, vector<1x256x36xbf16>
    %1 = vector.shape_cast %0 : vector<1x256x36xbf16> to vector<256x36xbf16>
    %c0_2 = arith.constant 0 : index
    %c0_3 = arith.constant 0 : index
    %2 = vector.load %arg2[%c0_2, %c0_3] : memref<36x32xbf16, #tpu.memory_space<vmem>>, vector<36x32xbf16>
    %cst = arith.constant dense<0.000000e+00> : vector<256x32xf32>
    %3 = tpu.matmul %1, %2, %cst {dimension_numbers = #tpu.dot_dimension_numbers<[1], [0], [0], [1], [0, 0, 1, 1], [], []>} : vector<256x36xbf16>, vector<36x32xbf16>, vector<256x32xf32> -> vector<256x32xf32>
    %c0_4 = arith.constant 0 : index
    %c0_5 = arith.constant 0 : index
    %4 = vector.load %arg3[%c0_4, %c0_5] : memref<1x32xf32, #tpu.memory_space<vmem>>, vector<1x32xf32>
    %5 = vector.broadcast %4 : vector<1x32xf32> to vector<256x32xf32>
    %6 = arith.addf %3, %5 : vector<256x32xf32>
    %cst_6 = arith.constant 0.000000e+00 : f32
    %7 = vector.broadcast %cst_6 : f32 to vector<256x32xf32>
    %8 = arith.subf %7, %6 : vector<256x32xf32>
    %9 = math.exp %8 : vector<256x32xf32>
    %cst_7 = arith.constant 1.000000e+00 : f32
    %10 = vector.broadcast %cst_7 : f32 to vector<256x32xf32>
    %11 = arith.addf %10, %9 : vector<256x32xf32>
    %12 = tpu.reciprocal %11 {approx = true} : vector<256x32xf32> -> vector<256x32xf32>
    %13 = arith.mulf %6, %12 : vector<256x32xf32>
    %14 = arith.truncf %13 : vector<256x32xf32> to vector<256x32xbf16>
    %c0_8 = arith.constant 0 : index
    %c0_9 = arith.constant 0 : index
    %15 = vector.load %arg4[%c0_8, %c0_9] : memref<32x64xbf16, #tpu.memory_space<vmem>>, vector<32x64xbf16>
    %cst_10 = arith.constant dense<0.000000e+00> : vector<256x64xf32>
    %16 = tpu.matmul %14, %15, %cst_10 {dimension_numbers = #tpu.dot_dimension_numbers<[1], [0], [0], [1], [0, 0, 1, 1], [], []>} : vector<256x32xbf16>, vector<32x64xbf16>, vector<256x64xf32> -> vector<256x64xf32>
    %c0_11 = arith.constant 0 : index
    %c0_12 = arith.constant 0 : index
    %17 = vector.load %arg5[%c0_11, %c0_12] : memref<1x64xf32, #tpu.memory_space<vmem>>, vector<1x64xf32>
    %18 = vector.broadcast %17 : vector<1x64xf32> to vector<256x64xf32>
    %19 = arith.addf %16, %18 : vector<256x64xf32>
    %cst_13 = arith.constant 0.000000e+00 : f32
    %20 = vector.broadcast %cst_13 : f32 to vector<256x64xf32>
    %21 = arith.subf %20, %19 : vector<256x64xf32>
    %22 = math.exp %21 : vector<256x64xf32>
    %cst_14 = arith.constant 1.000000e+00 : f32
    %23 = vector.broadcast %cst_14 : f32 to vector<256x64xf32>
    %24 = arith.addf %23, %22 : vector<256x64xf32>
    %25 = tpu.reciprocal %24 {approx = true} : vector<256x64xf32> -> vector<256x64xf32>
    %26 = arith.mulf %19, %25 : vector<256x64xf32>
    %c0_15 = arith.constant 0 : index
    %27 = memref.load %arg10[%c0_15] : memref<1xf32, #tpu.memory_space<smem>>
    %cst_16 = arith.constant 9.99999997E-7 : f32
    %28 = vector.broadcast %cst_16 : f32 to vector<256x64xf32>
    %29 = arith.maximumf %26, %28 : vector<256x64xf32>
    %30 = math.log %29 : vector<256x64xf32>
    %31 = vector.broadcast %27 : f32 to vector<256x64xf32>
    %32 = arith.mulf %31, %30 : vector<256x64xf32>
    %33 = math.exp %32 : vector<256x64xf32>
    %cst_17 = arith.constant 1.000000e+00 : f32
    %34 = vector.broadcast %cst_17 : f32 to vector<1x256xf32>
    %cst_18 = arith.constant dense<0.000000e+00> : vector<1x64xf32>
    %35 = tpu.matmul %34, %33, %cst_18 {dimension_numbers = #tpu.dot_dimension_numbers<[1], [0], [0], [1], [0, 0, 1, 1], [], []>} : vector<1x256xf32>, vector<256x64xf32>, vector<1x64xf32> -> vector<1x64xf32>
    %cst_19 = arith.constant 3.906250e-03 : f32
    %36 = vector.broadcast %cst_19 : f32 to vector<1x64xf32>
    %37 = arith.mulf %35, %36 : vector<1x64xf32>
    %38 = math.log %37 : vector<1x64xf32>
    %cst_20 = arith.constant 1.000000e+00 : f32
    %39 = arith.divf %cst_20, %27 : f32
    %40 = vector.broadcast %39 : f32 to vector<1x64xf32>
    %41 = arith.mulf %38, %40 : vector<1x64xf32>
    %42 = math.exp %41 : vector<1x64xf32>
    %43 = arith.truncf %42 : vector<1x64xf32> to vector<1x64xbf16>
    %c0_21 = arith.constant 0 : index
    %c0_22 = arith.constant 0 : index
    %44 = vector.load %arg6[%c0_21, %c0_22] : memref<64x128xbf16, #tpu.memory_space<vmem>>, vector<64x128xbf16>
    %cst_23 = arith.constant dense<0.000000e+00> : vector<1x128xf32>
    %45 = tpu.matmul %43, %44, %cst_23 {dimension_numbers = #tpu.dot_dimension_numbers<[1], [0], [0], [1], [0, 0, 1, 1], [], []>} : vector<1x64xbf16>, vector<64x128xbf16>, vector<1x128xf32> -> vector<1x128xf32>
    %c0_24 = arith.constant 0 : index
    %c0_25 = arith.constant 0 : index
    %46 = vector.load %arg7[%c0_24, %c0_25] : memref<1x128xf32, #tpu.memory_space<vmem>>, vector<1x128xf32>
    %47 = arith.addf %45, %46 : vector<1x128xf32>
    %cst_26 = arith.constant 0.000000e+00 : f32
    %48 = vector.broadcast %cst_26 : f32 to vector<1x128xf32>
    %49 = arith.maximumf %47, %48 : vector<1x128xf32>
    %50 = arith.truncf %49 : vector<1x128xf32> to vector<1x128xbf16>
    %c0_27 = arith.constant 0 : index
    %c0_28 = arith.constant 0 : index
    %51 = vector.load %arg8[%c0_27, %c0_28] : memref<128x128xbf16, #tpu.memory_space<vmem>>, vector<128x128xbf16>
    %cst_29 = arith.constant dense<0.000000e+00> : vector<1x128xf32>
    %52 = tpu.matmul %50, %51, %cst_29 {dimension_numbers = #tpu.dot_dimension_numbers<[1], [0], [0], [1], [0, 0, 1, 1], [], []>} : vector<1x128xbf16>, vector<128x128xbf16>, vector<1x128xf32> -> vector<1x128xf32>
    %c0_30 = arith.constant 0 : index
    %c0_31 = arith.constant 0 : index
    %53 = vector.load %arg9[%c0_30, %c0_31] : memref<1x128xf32, #tpu.memory_space<vmem>>, vector<1x128xf32>
    %54 = arith.addf %52, %53 : vector<1x128xf32>
    %55 = vector.shape_cast %54 : vector<1x128xf32> to vector<1x1x128xf32>
    %c0_32 = arith.constant 0 : index
    %c0_33 = arith.constant 0 : index
    %c0_34 = arith.constant 0 : index
    %56 = vector.load %arg11[%c0_32, %c0_33, %c0_34] : memref<1x1x128xf32, #tpu.memory_space<vmem>>, vector<1x1x128xf32>
    tpu.vector_store %arg11[%c0_32, %c0_33, %c0_34], %55 {strides = array<i32>} : memref<1x1x128xf32, #tpu.memory_space<vmem>>, vector<1x1x128xf32>,
    return
  }
  func.func @transform_0(%arg0: i32) -> (i32, i32, i32) {
    %c0_i32 = arith.constant 0 : i32
    %c0_i32_0 = arith.constant 0 : i32
    %c0_i32_1 = arith.constant 0 : i32
    return %arg0, %c0_i32, %c0_i32_0 : i32, i32, i32
  }
  func.func @transform_1(%arg0: i32) -> (i32, i32) {
    %c0_i32 = arith.constant 0 : i32
    %c0_i32_0 = arith.constant 0 : i32
    %c0_i32_1 = arith.constant 0 : i32
    return %c0_i32, %c0_i32_0 : i32, i32
  }
  func.func @transform_2(%arg0: i32) -> (i32, i32) {
    %c0_i32 = arith.constant 0 : i32
    %c0_i32_0 = arith.constant 0 : i32
    %c0_i32_1 = arith.constant 0 : i32
    return %c0_i32, %c0_i32_0 : i32, i32
  }
  func.func @transform_3(%arg0: i32) -> (i32, i32) {
    %c0_i32 = arith.constant 0 : i32
    %c0_i32_0 = arith.constant 0 : i32
    %c0_i32_1 = arith.constant 0 : i32
    return %c0_i32, %c0_i32_0 : i32, i32
  }
  func.func @transform_4(%arg0: i32) -> (i32, i32) {
    %c0_i32 = arith.constant 0 : i32
    %c0_i32_0 = arith.constant 0 : i32
    %c0_i32_1 = arith.constant 0 : i32
    return %c0_i32, %c0_i32_0 : i32, i32
  }
  func.func @transform_5(%arg0: i32) -> (i32, i32) {
    %c0_i32 = arith.constant 0 : i32
    %c0_i32_0 = arith.constant 0 : i32
    %c0_i32_1 = arith.constant 0 : i32
    return %c0_i32, %c0_i32_0 : i32, i32
  }
  func.func @transform_6(%arg0: i32) -> (i32, i32) {
    %c0_i32 = arith.constant 0 : i32
    %c0_i32_0 = arith.constant 0 : i32
    %c0_i32_1 = arith.constant 0 : i32
    return %c0_i32, %c0_i32_0 : i32, i32
  }
  func.func @transform_7(%arg0: i32) -> (i32, i32) {
    %c0_i32 = arith.constant 0 : i32
    %c0_i32_0 = arith.constant 0 : i32
    %c0_i32_1 = arith.constant 0 : i32
    return %c0_i32, %c0_i32_0 : i32, i32
  }
  func.func @transform_8(%arg0: i32) -> (i32, i32) {
    %c0_i32 = arith.constant 0 : i32
    %c0_i32_0 = arith.constant 0 : i32
    %c0_i32_1 = arith.constant 0 : i32
    return %c0_i32, %c0_i32_0 : i32, i32
  }
  func.func @transform_9(%arg0: i32) -> i32 {
    %c0_i32 = arith.constant 0 : i32
    %c0_i32_0 = arith.constant 0 : i32
    return %c0_i32 : i32
  }
  func.func @transform_10(%arg0: i32) -> (i32, i32, i32) {
    %c0_i32 = arith.constant 0 : i32
    %c0_i32_0 = arith.constant 0 : i32
    %c0_i32_1 = arith.constant 0 : i32
    return %arg0, %c0_i32, %c0_i32_0 : i32, i32, i32
  }
}

</mosaic_0001>

<llo_original>
// kernel: efficinet_net_fn_forward.1
$region0: #{efficinet_net_fn_forward.1}
  #allocation0 [shape = 'u32[]', space=smem, size = 0x4, offset = 0x4, fixed_abs, tag = 'smem constant byte address 0x4 - core index']
  #allocation1 [shape = 'u32[144,128]{1,0:T(1,128)}', space=vmem, size = 0x12000, scoped, tag = 'internal scratch']
  #allocation2 [shape = 'f32[1]{0:T(128)S(6)}', space=smem, size = 0x200, scoped, tag = 'scoped memory for efficinet_net_fn_forward.1']
  %s0 = inlined_call_operand.vmem [shape: bf16[2,256,36], index: 0, kind: input, shape index: {}]
  %s1 = inlined_call_operand.vmem [shape: bf16[36,32], index: 1, kind: input, shape index: {}]
  %s2 = inlined_call_operand.vmem [shape: f32[1,32], index: 2, kind: input, shape index: {}]
  %s3 = inlined_call_operand.vmem [shape: bf16[32,64], index: 3, kind: input, shape index: {}]
  %s4 = inlined_call_operand.vmem [shape: f32[1,64], index: 4, kind: input, shape index: {}]
  %s5 = inlined_call_operand.vmem [shape: bf16[64,128], index: 5, kind: input, shape index: {}]
  %s6 = inlined_call_operand.vmem [shape: f32[1,128], index: 6, kind: input, shape index: {}]
  %s7 = inlined_call_operand.vmem [shape: bf16[128,128], index: 7, kind: input, shape index: {}]
  %s8 = inlined_call_operand.vmem [shape: f32[1,128], index: 8, kind: input, shape index: {}]
  %s9 = inlined_call_operand.<no memory space> [shape: f32[1], index: 9, kind: input, shape index: {}]
  %s10 = inlined_call_operand.hbm [shape: f32[2,1,128], index: 10, kind: output, shape index: {}]
  %s11 = sld [smem:[#allocation0]]
  $region73: #{efficinet_net_fn_forward.1} parent=0
    _
  %s13 = ssub.s32 1, %s11
  %s14 = scalar_select 0, %s13, %s11
  %15 = sst [smem:[#allocation2]] %s9
  $region1: #{efficinet_net_fn_forward.1} parent=0
    #allocation3 [shape = 'u8[1024]{0}', space=vmem, size = 0x400, scoped, tag = 'output window, operand 0']
    #allocation4 [shape = 's32[2]{0}', space=sflag, size = 0x8, scoped, tag = 'scoped memory for efficinet_net_fn_forward.1']
    %16 = vsyncpa [#allocation4], 0
    %s17 = scalar_lea.sflag [#allocation4], 1
    %18 = vsyncpa %s17, 0
    loop: start=0, step=1, limit=4
    $region2: #{efficinet_net_fn_forward.1} parent=1 // loop_pre_header
      _
    $region3: #{efficinet_net_fn_forward.1} parent=1 // loop_header
      %s20 = sphi 0, %s24
      %p21 = scmp.ge.s32.totalorder %s20, 4
      %s30 = sphi 0, %s32
      %s33 = sphi 0, %s30
      %s34 = sphi 0, %s33
      %s50 = sphi 0, %s34
      %s54 = sphi 0, %s54
      %s56 = sphi 0, %s54
      %s57 = sphi 0, %s56
      %s71 = sphi 0, %s57
      %s75 = sphi 0, %s75
      %s77 = sphi 0, %s75
      %s78 = sphi 0, %s77
      %s92 = sphi 0, %s78
      %s96 = sphi 0, %s96
      %s98 = sphi 0, %s96
      %s99 = sphi 0, %s98
      %s113 = sphi 0, %s99
      %s117 = sphi 0, %s117
      %s119 = sphi 0, %s117
      %s120 = sphi 0, %s119
      %s134 = sphi 0, %s120
      %s138 = sphi 0, %s138
      %s140 = sphi 0, %s138
      %s141 = sphi 0, %s140
      %s155 = sphi 0, %s141
      %s159 = sphi 0, %s159
      %s161 = sphi 0, %s159
      %s162 = sphi 0, %s161
      %s176 = sphi 0, %s162
      %s180 = sphi 0, %s180
      %s182 = sphi 0, %s180
      %s183 = sphi 0, %s182
      %s197 = sphi 0, %s183
      %s201 = sphi 0, %s201
      %s203 = sphi 0, %s201
      %s204 = sphi 0, %s203
      %s218 = sphi 0, %s204
      %s222 = sphi 0, %s222
      %s224 = sphi 0, %s222
      %s225 = sphi 0, %s224
      %s239 = sphi 0, %s225
      %s245 = sphi 0, %s247
      %s248 = sphi 0, %s245
      %s249 = sphi 0, %s248
      %s265 = sphi 0, %s249
    $region4: #{efficinet_net_fn_forward.1} parent=1 // loop_header_branch
      %23 = sbr.rel (%p21) target = $region8
    $region5: #{efficinet_net_fn_forward.1} parent=1 // loop_body
      %s25 = ssub.s32 %s20, 1
      %s26 = ssub.s32 %s20, 2
      %s27 = sadd.s32 %s20, 1
      %s28 = ssub.s32 %s20, %s27
      %p29 = scmp.eq.s32.totalorder %s28, 0
      %s31 = sadd.s32 %s30, 1
      %s32 = scalar_select %p29, %s30, %s31
      %p35 = pneg %p29
      %p36 = scmp.eq.s32.totalorder %s20, 1
      %p37 = por %p35, %p36
      %p38 = scmp.ne.s32.totalorder %s30, %s33
      %p39 = scmp.eq.s32.totalorder %s20, 0
      %p40 = por %p38, %p39
      %p41 = scmp.ne.s32.totalorder %s30, %s33
      %p42 = scmp.eq.s32.totalorder %s25, 1
      %p43 = por %p41, %p42
      %p44 = scmp.ne.s32.totalorder %s33, %s34
      %p45 = scmp.eq.s32.totalorder %s25, 0
      %p46 = por %p44, %p45
      %p47 = scmp.ne.s32.totalorder %s33, %s34
      %p48 = scmp.eq.s32.totalorder %s26, 1
      %p49 = por %p47, %p48
      %p51 = scmp.ne.s32.totalorder %s34, %s50
      %p52 = scmp.eq.s32.totalorder %s26, 0
      %p53 = por %p51, %p52
      %s55 = sadd.s32 %s54, 1
      %p58 = scmp.eq.s32.totalorder %s20, 1
      %p59 = scmp.ne.s32.totalorder %s54, %s56
      %p60 = scmp.eq.s32.totalorder %s20, 0
      %p61 = por %p59, %p60
      %p62 = scmp.ne.s32.totalorder %s54, %s56
      %p63 = scmp.eq.s32.totalorder %s25, 1
      %p64 = por %p62, %p63
      %p65 = scmp.ne.s32.totalorder %s56, %s57
      %p66 = scmp.eq.s32.totalorder %s25, 0
      %p67 = por %p65, %p66
      %p68 = scmp.ne.s32.totalorder %s56, %s57
      %p69 = scmp.eq.s32.totalorder %s26, 1
      %p70 = por %p68, %p69
      %p72 = scmp.ne.s32.totalorder %s57, %s71
      %p73 = scmp.eq.s32.totalorder %s26, 0
      %p74 = por %p72, %p73
      %s76 = sadd.s32 %s75, 1
      %p79 = scmp.eq.s32.totalorder %s20, 1
      %p80 = scmp.ne.s32.totalorder %s75, %s77
      %p81 = scmp.eq.s32.totalorder %s20, 0
      %p82 = por %p80, %p81
      %p83 = scmp.ne.s32.totalorder %s75, %s77
      %p84 = scmp.eq.s32.totalorder %s25, 1
      %p85 = por %p83, %p84
      %p86 = scmp.ne.s32.totalorder %s77, %s78
      %p87 = scmp.eq.s32.totalorder %s25, 0
      %p88 = por %p86, %p87
      %p89 = scmp.ne.s32.totalorder %s77, %s78
      %p90 = scmp.eq.s32.totalorder %s26, 1
      %p91 = por %p89, %p90
      %p93 = scmp.ne.s32.totalorder %s78, %s92
      %p94 = scmp.eq.s32.totalorder %s26, 0
      %p95 = por %p93, %p94
      %s97 = sadd.s32 %s96, 1
      %p100 = scmp.eq.s32.totalorder %s20, 1
      %p101 = scmp.ne.s32.totalorder %s96, %s98
      %p102 = scmp.eq.s32.totalorder %s20, 0
      %p103 = por %p101, %p102
      %p104 = scmp.ne.s32.totalorder %s96, %s98
      %p105 = scmp.eq.s32.totalorder %s25, 1
      %p106 = por %p104, %p105
      %p107 = scmp.ne.s32.totalorder %s98, %s99
      %p108 = scmp.eq.s32.totalorder %s25, 0
      %p109 = por %p107, %p108
      %p110 = scmp.ne.s32.totalorder %s98, %s99
      %p111 = scmp.eq.s32.totalorder %s26, 1
      %p112 = por %p110, %p111
      %p114 = scmp.ne.s32.totalorder %s99, %s113
      %p115 = scmp.eq.s32.totalorder %s26, 0
      %p116 = por %p114, %p115
      %s118 = sadd.s32 %s117, 1
      %p121 = scmp.eq.s32.totalorder %s20, 1
      %p122 = scmp.ne.s32.totalorder %s117, %s119
      %p123 = scmp.eq.s32.totalorder %s20, 0
      %p124 = por %p122, %p123
      %p125 = scmp.ne.s32.totalorder %s117, %s119
      %p126 = scmp.eq.s32.totalorder %s25, 1
      %p127 = por %p125, %p126
      %p128 = scmp.ne.s32.totalorder %s119, %s120
      %p129 = scmp.eq.s32.totalorder %s25, 0
      %p130 = por %p128, %p129
      %p131 = scmp.ne.s32.totalorder %s119, %s120
      %p132 = scmp.eq.s32.totalorder %s26, 1
      %p133 = por %p131, %p132
      %p135 = scmp.ne.s32.totalorder %s120, %s134
      %p136 = scmp.eq.s32.totalorder %s26, 0
      %p137 = por %p135, %p136
      %s139 = sadd.s32 %s138, 1
      %p142 = scmp.eq.s32.totalorder %s20, 1
      %p143 = scmp.ne.s32.totalorder %s138, %s140
      %p144 = scmp.eq.s32.totalorder %s20, 0
      %p145 = por %p143, %p144
      %p146 = scmp.ne.s32.totalorder %s138, %s140
      %p147 = scmp.eq.s32.totalorder %s25, 1
      %p148 = por %p146, %p147
      %p149 = scmp.ne.s32.totalorder %s140, %s141
      %p150 = scmp.eq.s32.totalorder %s25, 0
      %p151 = por %p149, %p150
      %p152 = scmp.ne.s32.totalorder %s140, %s141
      %p153 = scmp.eq.s32.totalorder %s26, 1
      %p154 = por %p152, %p153
      %p156 = scmp.ne.s32.totalorder %s141, %s155
      %p157 = scmp.eq.s32.totalorder %s26, 0
      %p158 = por %p156, %p157
      %s160 = sadd.s32 %s159, 1
      %p163 = scmp.eq.s32.totalorder %s20, 1
      %p164 = scmp.ne.s32.totalorder %s159, %s161
      %p165 = scmp.eq.s32.totalorder %s20, 0
      %p166 = por %p164, %p165
      %p167 = scmp.ne.s32.totalorder %s159, %s161
      %p168 = scmp.eq.s32.totalorder %s25, 1
      %p169 = por %p167, %p168
      %p170 = scmp.ne.s32.totalorder %s161, %s162
      %p171 = scmp.eq.s32.totalorder %s25, 0
      %p172 = por %p170, %p171
      %p173 = scmp.ne.s32.totalorder %s161, %s162
      %p174 = scmp.eq.s32.totalorder %s26, 1
      %p175 = por %p173, %p174
      %p177 = scmp.ne.s32.totalorder %s162, %s176
      %p178 = scmp.eq.s32.totalorder %s26, 0
      %p179 = por %p177, %p178
      %s181 = sadd.s32 %s180, 1
      %p184 = scmp.eq.s32.totalorder %s20, 1
      %p185 = scmp.ne.s32.totalorder %s180, %s182
      %p186 = scmp.eq.s32.totalorder %s20, 0
      %p187 = por %p185, %p186
      %p188 = scmp.ne.s32.totalorder %s180, %s182
      %p189 = scmp.eq.s32.totalorder %s25, 1
      %p190 = por %p188, %p189
      %p191 = scmp.ne.s32.totalorder %s182, %s183
      %p192 = scmp.eq.s32.totalorder %s25, 0
      %p193 = por %p191, %p192
      %p194 = scmp.ne.s32.totalorder %s182, %s183
      %p195 = scmp.eq.s32.totalorder %s26, 1
      %p196 = por %p194, %p195
      %p198 = scmp.ne.s32.totalorder %s183, %s197
      %p199 = scmp.eq.s32.totalorder %s26, 0
      %p200 = por %p198, %p199
      %s202 = sadd.s32 %s201, 1
      %p205 = scmp.eq.s32.totalorder %s20, 1
      %p206 = scmp.ne.s32.totalorder %s201, %s203
      %p207 = scmp.eq.s32.totalorder %s20, 0
      %p208 = por %p206, %p207
      %p209 = scmp.ne.s32.totalorder %s201, %s203
      %p210 = scmp.eq.s32.totalorder %s25, 1
      %p211 = por %p209, %p210
      %p212 = scmp.ne.s32.totalorder %s203, %s204
      %p213 = scmp.eq.s32.totalorder %s25, 0
      %p214 = por %p212, %p213
      %p215 = scmp.ne.s32.totalorder %s203, %s204
      %p216 = scmp.eq.s32.totalorder %s26, 1
      %p217 = por %p215, %p216
      %p219 = scmp.ne.s32.totalorder %s204, %s218
      %p220 = scmp.eq.s32.totalorder %s26, 0
      %p221 = por %p219, %p220
      %s223 = sadd.s32 %s222, 1
      %p226 = scmp.eq.s32.totalorder %s20, 1
      %p227 = scmp.ne.s32.totalorder %s222, %s224
      %p228 = scmp.eq.s32.totalorder %s20, 0
      %p229 = por %p227, %p228
      %p230 = scmp.ne.s32.totalorder %s222, %s224
      %p231 = scmp.eq.s32.totalorder %s25, 1
      %p232 = por %p230, %p231
      %p233 = scmp.ne.s32.totalorder %s224, %s225
      %p234 = scmp.eq.s32.totalorder %s25, 0
      %p235 = por %p233, %p234
      %p236 = scmp.ne.s32.totalorder %s224, %s225
      %p237 = scmp.eq.s32.totalorder %s26, 1
      %p238 = por %p236, %p237
      %p240 = scmp.ne.s32.totalorder %s225, %s239
      %p241 = scmp.eq.s32.totalorder %s26, 0
      %p242 = por %p240, %p241
      %s243 = ssub.s32 %s20, %s27
      %p244 = scmp.eq.s32.totalorder %s243, 0
      %s246 = sadd.s32 %s245, 1
      %s247 = scalar_select %p244, %s245, %s246
      %p250 = pneg %p244
      %p251 = scmp.eq.s32.totalorder %s20, 1
      %p252 = por %p250, %p251
      %p253 = scmp.ne.s32.totalorder %s245, %s248
      %p254 = scmp.eq.s32.totalorder %s20, 0
      %p255 = por %p253, %p254
      %p256 = scmp.ne.s32.totalorder %s245, %s248
      %p257 = scmp.eq.s32.totalorder %s25, 1
      %p258 = por %p256, %p257
      %p259 = scmp.ne.s32.totalorder %s248, %s249
      %p260 = scmp.eq.s32.totalorder %s25, 0
      %p261 = por %p259, %p260
      %p262 = scmp.ne.s32.totalorder %s248, %s249
      %p263 = scmp.eq.s32.totalorder %s26, 1
      %p264 = por %p262, %p263
      %p266 = scmp.ne.s32.totalorder %s249, %s265
      %p267 = scmp.eq.s32.totalorder %s26, 0
      %p268 = por %p266, %p267
      %p269 = scmp.le.s32.totalorder 1, %s20
      %p270 = scmp.lt.s32.totalorder %s20, 3
      %p271 = pnand %p269, %p270
      %p272 = pneg %p271
      // Predicated region
      $region9: #{efficinet_net_fn_forward.1} parent=5 // pred_check
        _
      $region10: #{efficinet_net_fn_forward.1} parent=5 // pred_check_branch
        %274 = sbr.rel (%p271) target = $region12
      $region11: #{efficinet_net_fn_forward.1} parent=5 // pred_region
        %s275 = ssub.s32 %s20, 1
        // Predicated region
        $region13: #{efficinet_net_fn_forward.1} parent=11 // pred_check
          %p276 = pneg %p67
        $region14: #{efficinet_net_fn_forward.1} parent=11 // pred_check_branch
          %278 = sbr.rel (%p276) target = $region16
        $region15: #{efficinet_net_fn_forward.1} parent=11 // pred_region
          _
        $region16: #{efficinet_net_fn_forward.1} parent=11 // pred_fallthru
          _
        // Predicated region
        $region17: #{efficinet_net_fn_forward.1} parent=11 // pred_check
          %p279 = pneg %p88
        $region18: #{efficinet_net_fn_forward.1} parent=11 // pred_check_branch
          %281 = sbr.rel (%p279) target = $region20
        $region19: #{efficinet_net_fn_forward.1} parent=11 // pred_region
          _
        $region20: #{efficinet_net_fn_forward.1} parent=11 // pred_fallthru
          _
        // Predicated region
        $region21: #{efficinet_net_fn_forward.1} parent=11 // pred_check
          %p282 = pneg %p109
        $region22: #{efficinet_net_fn_forward.1} parent=11 // pred_check_branch
          %284 = sbr.rel (%p282) target = $region24
        $region23: #{efficinet_net_fn_forward.1} parent=11 // pred_region
          _
        $region24: #{efficinet_net_fn_forward.1} parent=11 // pred_fallthru
          _
        // Predicated region
        $region25: #{efficinet_net_fn_forward.1} parent=11 // pred_check
          %p285 = pneg %p130
        $region26: #{efficinet_net_fn_forward.1} parent=11 // pred_check_branch
          %287 = sbr.rel (%p285) target = $region28
        $region27: #{efficinet_net_fn_forward.1} parent=11 // pred_region
          _
        $region28: #{efficinet_net_fn_forward.1} parent=11 // pred_fallthru
          _
        // Predicated region
        $region29: #{efficinet_net_fn_forward.1} parent=11 // pred_check
          %p288 = pneg %p151
        $region30: #{efficinet_net_fn_forward.1} parent=11 // pred_check_branch
          %290 = sbr.rel (%p288) target = $region32
        $region31: #{efficinet_net_fn_forward.1} parent=11 // pred_region
          _
        $region32: #{efficinet_net_fn_forward.1} parent=11 // pred_fallthru
          _
        // Predicated region
        $region33: #{efficinet_net_fn_forward.1} parent=11 // pred_check
          %p291 = pneg %p172
        $region34: #{efficinet_net_fn_forward.1} parent=11 // pred_check_branch
          %293 = sbr.rel (%p291) target = $region36
        $region35: #{efficinet_net_fn_forward.1} parent=11 // pred_region
          _
        $region36: #{efficinet_net_fn_forward.1} parent=11 // pred_fallthru
          _
        // Predicated region
        $region37: #{efficinet_net_fn_forward.1} parent=11 // pred_check
          %p294 = pneg %p193
        $region38: #{efficinet_net_fn_forward.1} parent=11 // pred_check_branch
          %296 = sbr.rel (%p294) target = $region40
        $region39: #{efficinet_net_fn_forward.1} parent=11 // pred_region
          _
        $region40: #{efficinet_net_fn_forward.1} parent=11 // pred_fallthru
          _
        // Predicated region
        $region41: #{efficinet_net_fn_forward.1} parent=11 // pred_check
          %p297 = pneg %p214
        $region42: #{efficinet_net_fn_forward.1} parent=11 // pred_check_branch
          %299 = sbr.rel (%p297) target = $region44
        $region43: #{efficinet_net_fn_forward.1} parent=11 // pred_region
          _
        $region44: #{efficinet_net_fn_forward.1} parent=11 // pred_fallthru
          _
        // Predicated region
        $region45: #{efficinet_net_fn_forward.1} parent=11 // pred_check
          %p300 = pneg %p235
        $region46: #{efficinet_net_fn_forward.1} parent=11 // pred_check_branch
          %302 = sbr.rel (%p300) target = $region48
        $region47: #{efficinet_net_fn_forward.1} parent=11 // pred_region
          _
        $region48: #{efficinet_net_fn_forward.1} parent=11 // pred_fallthru
          _
      $region12: #{efficinet_net_fn_forward.1} parent=5 // pred_fallthru
        _
      %p303 = scmp.lt.s32.totalorder %s20, 2
      // Predicated region
      $region49: #{efficinet_net_fn_forward.1} parent=5 // pred_check
        %p304 = pneg %p303
      $region50: #{efficinet_net_fn_forward.1} parent=5 // pred_check_branch
        %306 = sbr.rel (%p304) target = $region52
      $region51: #{efficinet_net_fn_forward.1} parent=5 // pred_region
        // Predicated region
        $region53: #{efficinet_net_fn_forward.1} parent=51 // pred_check
          %p307 = pneg %p40
        $region54: #{efficinet_net_fn_forward.1} parent=51 // pred_check_branch
          %309 = sbr.rel (%p307) target = $region56
        $region55: #{efficinet_net_fn_forward.1} parent=51 // pred_region
          %p310 = scmp.lt.s32.totalorder %s20, 1
          %s311 = scalar_select %p310, %s20, 1
          %s312 = smul.addr %s311, 32
          %s313 = smul.addr %s312, 4
          %s314 = scalar_lea.vmem %s0, %s313
        $region56: #{efficinet_net_fn_forward.1} parent=51 // pred_fallthru
          _
      $region52: #{efficinet_net_fn_forward.1} parent=5 // pred_fallthru
        _
      %p315 = scmp.le.s32.totalorder 1, %s20
      %p316 = scmp.lt.s32.totalorder %s20, 3
      %p317 = pnand %p315, %p316
      %p318 = pneg %p317
      // Predicated region
      $region57: #{efficinet_net_fn_forward.1} parent=5 // pred_check
        _
      $region58: #{efficinet_net_fn_forward.1} parent=5 // pred_check_branch
        %320 = sbr.rel (%p317) target = $region60
      $region59: #{efficinet_net_fn_forward.1} parent=5 // pred_region
        %s321 = ssub.s32 %s20, 1
        %p322 = scmp.lt.s32.totalorder %s25, 1
        %s323 = scalar_select %p322, %s25, 1
        %s324 = smul.addr %s323, 32
        %s325 = smul.addr %s324, 4
        %s326 = scalar_lea.vmem %s0, %s325
        %p327 = pneg %p46
        %p328 = pneg %p43
        %p329 = pneg %p67
        %p330 = pneg %p64
        %p331 = pneg %p88
        %p332 = pneg %p85
        %p333 = pneg %p109
        %p334 = pneg %p106
        %p335 = pneg %p130
        %p336 = pneg %p127
        %p337 = pneg %p151
        %p338 = pneg %p148
        %p339 = pneg %p172
        %p340 = pneg %p169
        %p341 = pneg %p193
        %p342 = pneg %p190
        %p343 = pneg %p214
        %p344 = pneg %p211
        %p345 = pneg %p235
        %p346 = pneg %p232
        %p347 = pneg %p261
        %p348 = pneg %p258
        %s349 = sand.u32 %s248, 1
        %s350 = scalar_lea.sflag [#allocation4], %s349
        %s351 = sand.u32 %s248, 1
        %s352 = scalar_lea.vmem [#allocation3], %s351
        %p353 = scmp.lt.s32.totalorder %s25, 1
        %s354 = scalar_select %p353, %s25, 1
        %s355 = smul.addr %s354, 32
        %s356 = smul.addr %s355, 4
        %s357 = scalar_lea.vmem %s0, %s356
        %v359 = vld [vmem:[%s357] sm:$0xf]
        %v360 = vld [vmem:[%s357 + $0x4] sm:$0xf]
        %v361 = vld [vmem:[%s357 + $0x8] sm:$0xf]
        %v362 = vld [vmem:[%s357 + $0xc] sm:$0xf]
        %v363 = vld [vmem:[%s357 + $0x10] sm:$0xf]
        %v364 = vld [vmem:[%s357 + $0x14] sm:$0xf]
        %v365 = vld [vmem:[%s357 + $0x18] sm:$0xf]
        %v366 = vld [vmem:[%s357 + $0x1c] sm:$0xf]
        %v367 = vld [vmem:[%s357 + $0x20] sm:$0xf]
        %v368 = vld [vmem:[%s357 + $0x24] sm:$0xf]
        %v369 = vld [vmem:[%s357 + $0x28] sm:$0xf]
        %v370 = vld [vmem:[%s357 + $0x2c] sm:$0xf]
        %v371 = vld [vmem:[%s357 + $0x30] sm:$0xf]
        %v372 = vld [vmem:[%s357 + $0x34] sm:$0xf]
        %v373 = vld [vmem:[%s357 + $0x38] sm:$0xf]
        %v374 = vld [vmem:[%s357 + $0x3c] sm:$0xf]
        %v375 = vld [vmem:[%s357 + $0x40] sm:$0xf]
        %v376 = vld [vmem:[%s357 + $0x44] sm:$0xf]
        %v377 = vld [vmem:[%s357 + $0x48] sm:$0xf]
        %v378 = vld [vmem:[%s357 + $0x4c] sm:$0xf]
        %v379 = vld [vmem:[%s357 + $0x50] sm:$0xf]
        %v380 = vld [vmem:[%s357 + $0x54] sm:$0xf]
        %v381 = vld [vmem:[%s357 + $0x58] sm:$0xf]
        %v382 = vld [vmem:[%s357 + $0x5c] sm:$0xf]
        %v383 = vld [vmem:[%s357 + $0x60] sm:$0xf]
        %v384 = vld [vmem:[%s357 + $0x64] sm:$0xf]
        %v385 = vld [vmem:[%s357 + $0x68] sm:$0xf]
        %v386 = vld [vmem:[%s357 + $0x6c] sm:$0xf]
        %v387 = vld [vmem:[%s357 + $0x70] sm:$0xf]
        %v388 = vld [vmem:[%s357 + $0x74] sm:$0xf]
        %v389 = vld [vmem:[%s357 + $0x78] sm:$0xf]
        %v390 = vld [vmem:[%s357 + $0x7c] sm:$0xf]
        %v391 = vld [vmem:[%s1] sm:$0xf]
        %v392 = vld [vmem:[%s1 + $0x4] sm:$0xf]
        %v393 = vld [vmem:[%s1 + $0x8] sm:$0xf]
        %v394 = vld [vmem:[%s1 + $0xc] sm:$0xf]
        %v395 = vld [vmem:[%s1 + $0x10] sm:$0x3]
        %v396 = vld [vmem:[%s2] sm:$0x1]
        %v398 = vlaneseq
        %v399 = vshrl.u32 %v398, 7
        %v400 = vsub.s32 0, %v399
        %v401 = vrot.slane %v396, %v400
        %v435 = vunpack.c.l.b16 %v359
        %v436 = vunpack.c.l.b16 %v360
        %v437 = vunpack.c.l.b16 %v361
        %v438 = vunpack.c.l.b16 %v362
        %v439 = vunpack.c.l.b16 %v363
        %v440 = vunpack.c.l.b16 %v364
        %v441 = vunpack.c.l.b16 %v365
        %v442 = vunpack.c.l.b16 %v366
        %v443 = vunpack.c.l.b16 %v367
        %v444 = vunpack.c.l.b16 %v368
        %v445 = vunpack.c.l.b16 %v369
        %v446 = vunpack.c.l.b16 %v370
        %v447 = vunpack.c.l.b16 %v371
        %v448 = vunpack.c.l.b16 %v372
        %v449 = vunpack.c.l.b16 %v373
        %v450 = vunpack.c.l.b16 %v374
        %v451 = vunpack.c.l.b16 %v375
        %v452 = vunpack.c.l.b16 %v376
        %v453 = vunpack.c.l.b16 %v377
        %v454 = vunpack.c.l.b16 %v378
        %v455 = vunpack.c.l.b16 %v379
        %v456 = vunpack.c.l.b16 %v380
        %v457 = vunpack.c.l.b16 %v381
        %v458 = vunpack.c.l.b16 %v382
        %v459 = vunpack.c.l.b16 %v383
        %v460 = vunpack.c.l.b16 %v384
        %v461 = vunpack.c.l.b16 %v385
        %v462 = vunpack.c.l.b16 %v386
        %v463 = vunpack.c.l.b16 %v387
        %v464 = vunpack.c.l.b16 %v388
        %v465 = vunpack.c.l.b16 %v389
        %v466 = vunpack.c.l.b16 %v390
        %v467 = vpack.c.b16 %v436, %v435
        %v468 = vpack.c.b16 %v438, %v437
        %v469 = vpack.c.b16 %v440, %v439
        %v470 = vpack.c.b16 %v442, %v441
        %v471 = vpack.c.b16 %v444, %v443
        %v472 = vpack.c.b16 %v446, %v445
        %v473 = vpack.c.b16 %v448, %v447
        %v474 = vpack.c.b16 %v450, %v449
        %v475 = vpack.c.b16 %v452, %v451
        %v476 = vpack.c.b16 %v454, %v453
        %v477 = vpack.c.b16 %v456, %v455
        %v478 = vpack.c.b16 %v458, %v457
        %v479 = vpack.c.b16 %v460, %v459
        %v480 = vpack.c.b16 %v462, %v461
        %v481 = vpack.c.b16 %v464, %v463
        %v482 = vpack.c.b16 %v466, %v465
        %v488 = vunpack.c.l.b16 %v391
        %v489 = vunpack.c.l.b16 %v392
        %v490 = vunpack.c.l.b16 %v393
        %v491 = vunpack.c.l.b16 %v394
        %v492 = vunpack.c.l.b16 %v395
        %v493 = vpack.c.b16 %v489, %v488
        %v494 = vpack.c.b16 %v491, %v490
        %v495 = vpack.c.b16 %v492, %v492
        %vm498 = vcmask 293888
        %v500 = vsel %vm498, %v467, 0
        %v503 = vsel %vm498, %v468, 0
        %v506 = vsel %vm498, %v469, 0
        %v509 = vsel %vm498, %v470, 0
        %v512 = vsel %vm498, %v471, 0
        %v515 = vsel %vm498, %v472, 0
        %v518 = vsel %vm498, %v473, 0
        %v521 = vsel %vm498, %v474, 0
        %v524 = vsel %vm498, %v475, 0
        %v527 = vsel %vm498, %v476, 0
        %v530 = vsel %vm498, %v477, 0
        %v533 = vsel %vm498, %v478, 0
        %v536 = vsel %vm498, %v479, 0
        %v539 = vsel %vm498, %v480, 0
        %v542 = vsel %vm498, %v481, 0
        %v545 = vsel %vm498, %v482, 0
        %vm547 = vcmask 1041408
        %v549 = vsel %vm547, %v495, 0
        %551 = vmatprep.subr.bf16.mxu0 0
        %552 = vmatpush1.bf16.msra.mxu0 %v493
        %553 = vmatprep.subr.bf16.mxu0 0
        %554 = vmatpush1.bf16.msra.mxu0 %v494
        %555 = vmatprep.subr.bf16.mxu0 0
        %556 = vmatpush1.bf16.msra.mxu0 %v549
        %557 = vmatprep.subr.bf16.mxu0 0
        %558 = vmatpush1.bf16.msra.mxu0 0
        %559 = vmatprep.subr.bf16.mxu0 0
        %560 = vmatpush1.bf16.msra.mxu0 0
        %561 = vmatprep.subr.bf16.mxu0 0
        %562 = vmatpush1.bf16.msra.mxu0 0
        %563 = vmatprep.subr.bf16.mxu0 0
        %564 = vmatpush1.bf16.msra.mxu0 0
        %565 = vmatprep.subr.bf16.mxu0 0
        %566 = vmatpush1.bf16.msra.mxu0 0
        %567 = vmatprep.subr.bf16.mxu0 0
        %568 = vmatpush1.bf16.msra.mxu0 0
        %569 = vmatprep.subr.bf16.mxu0 0
        %570 = vmatpush1.bf16.msra.mxu0 0
        %571 = vmatprep.subr.bf16.mxu0 0
        %572 = vmatpush1.bf16.msra.mxu0 0
        %573 = vmatprep.subr.bf16.mxu0 0
        %574 = vmatpush1.bf16.msra.mxu0 0
        %575 = vmatprep.subr.bf16.mxu0 0
        %576 = vmatpush1.bf16.msra.mxu0 0
        %577 = vmatprep.subr.bf16.mxu0 0
        %578 = vmatpush1.bf16.msra.mxu0 0
        %579 = vmatprep.subr.bf16.mxu0 0
        %580 = vmatpush1.bf16.msra.mxu0 0
        %581 = vmatprep.subr.bf16.mxu0 0
        %582 = vmatpush1.bf16.msra.mxu0 0
        %583 = vmatprep.mubr.bf16.mxu0 0
        %584 = vmatmul.mubr.bf16.gmra.mrb[0].mxu0 %v500
        %v585 = vpop.f32.mrb[0].mxu0
        %v586 = vadd.f32 %v401, %v585
        %v587 = vpop.f32.mrb[0].mxu0
        %v588 = vpop.f32.mrb[0].mxu0
        %v589 = vadd.f32 %v401, %v588
        %v590 = vpop.f32.mrb[0].mxu0
        %591 = vmatprep.mubr.bf16.mxu0 0
        %592 = vmatmul.mubr.bf16.gmra.mrb[0].mxu0 %v503
        %v593 = vpop.f32.mrb[0].mxu0
        %v594 = vadd.f32 %v401, %v593
        %v595 = vpop.f32.mrb[0].mxu0
        %v596 = vpop.f32.mrb[0].mxu0
        %v597 = vadd.f32 %v401, %v596
        %v598 = vpop.f32.mrb[0].mxu0
        %599 = vmatprep.mubr.bf16.mxu0 0
        %600 = vmatmul.mubr.bf16.gmra.mrb[0].mxu0 %v506
        %v601 = vpop.f32.mrb[0].mxu0
        %v602 = vadd.f32 %v401, %v601
        %v603 = vpop.f32.mrb[0].mxu0
        %v604 = vpop.f32.mrb[0].mxu0
        %v605 = vadd.f32 %v401, %v604
        %v606 = vpop.f32.mrb[0].mxu0
        %607 = vmatprep.mubr.bf16.mxu0 0
        %608 = vmatmul.mubr.bf16.gmra.mrb[0].mxu0 %v509
        %v609 = vpop.f32.mrb[0].mxu0
        %v610 = vadd.f32 %v401, %v609
        %v611 = vpop.f32.mrb[0].mxu0
        %v612 = vpop.f32.mrb[0].mxu0
        %v613 = vadd.f32 %v401, %v612
        %v614 = vpop.f32.mrb[0].mxu0
        %615 = vmatprep.mubr.bf16.mxu0 0
        %616 = vmatmul.mubr.bf16.gmra.mrb[0].mxu0 %v512
        %v617 = vpop.f32.mrb[0].mxu0
        %v618 = vadd.f32 %v401, %v617
        %v619 = vpop.f32.mrb[0].mxu0
        %v620 = vpop.f32.mrb[0].mxu0
        %v621 = vadd.f32 %v401, %v620
        %v622 = vpop.f32.mrb[0].mxu0
        %623 = vmatprep.mubr.bf16.mxu0 0
        %624 = vmatmul.mubr.bf16.gmra.mrb[0].mxu0 %v515
        %v625 = vpop.f32.mrb[0].mxu0
        %v626 = vadd.f32 %v401, %v625
        %v627 = vpop.f32.mrb[0].mxu0
        %v628 = vpop.f32.mrb[0].mxu0
        %v629 = vadd.f32 %v401, %v628
        %v630 = vpop.f32.mrb[0].mxu0
        %631 = vmatprep.mubr.bf16.mxu0 0
        %632 = vmatmul.mubr.bf16.gmra.mrb[0].mxu0 %v518
        %v633 = vpop.f32.mrb[0].mxu0
        %v634 = vadd.f32 %v401, %v633
        %v635 = vpop.f32.mrb[0].mxu0
        %v636 = vpop.f32.mrb[0].mxu0
        %v637 = vadd.f32 %v401, %v636
        %v638 = vpop.f32.mrb[0].mxu0
        %639 = vmatprep.mubr.bf16.mxu0 0
        %640 = vmatmul.mubr.bf16.gmra.mrb[0].mxu0 %v521
        %v641 = vpop.f32.mrb[0].mxu0
        %v642 = vadd.f32 %v401, %v641
        %v643 = vpop.f32.mrb[0].mxu0
        %v644 = vpop.f32.mrb[0].mxu0
        %v645 = vadd.f32 %v401, %v644
        %v646 = vpop.f32.mrb[0].mxu0
        %647 = vmatprep.mubr.bf16.mxu0 0
        %648 = vmatmul.mubr.bf16.gmra.mrb[0].mxu0 %v524
        %v649 = vpop.f32.mrb[0].mxu0
        %v650 = vadd.f32 %v401, %v649
        %v651 = vpop.f32.mrb[0].mxu0
        %v652 = vpop.f32.mrb[0].mxu0
        %v653 = vadd.f32 %v401, %v652
        %v654 = vpop.f32.mrb[0].mxu0
        %655 = vmatprep.mubr.bf16.mxu0 0
        %656 = vmatmul.mubr.bf16.gmra.mrb[0].mxu0 %v527
        %v657 = vpop.f32.mrb[0].mxu0
        %v658 = vadd.f32 %v401, %v657
        %v659 = vpop.f32.mrb[0].mxu0
        %v660 = vpop.f32.mrb[0].mxu0
        %v661 = vadd.f32 %v401, %v660
        %v662 = vpop.f32.mrb[0].mxu0
        %663 = vmatprep.mubr.bf16.mxu0 0
        %664 = vmatmul.mubr.bf16.gmra.mrb[0].mxu0 %v530
        %v665 = vpop.f32.mrb[0].mxu0
        %v666 = vadd.f32 %v401, %v665
        %v667 = vpop.f32.mrb[0].mxu0
        %v668 = vpop.f32.mrb[0].mxu0
        %v669 = vadd.f32 %v401, %v668
        %v670 = vpop.f32.mrb[0].mxu0
        %671 = vmatprep.mubr.bf16.mxu0 0
        %672 = vmatmul.mubr.bf16.gmra.mrb[0].mxu0 %v533
        %v673 = vpop.f32.mrb[0].mxu0
        %v674 = vadd.f32 %v401, %v673
        %v675 = vpop.f32.mrb[0].mxu0
        %v676 = vpop.f32.mrb[0].mxu0
        %v677 = vadd.f32 %v401, %v676
        %v678 = vpop.f32.mrb[0].mxu0
        %679 = vmatprep.mubr.bf16.mxu0 0
        %680 = vmatmul.mubr.bf16.gmra.mrb[0].mxu0 %v536
        %v681 = vpop.f32.mrb[0].mxu0
        %v682 = vadd.f32 %v401, %v681
        %v683 = vpop.f32.mrb[0].mxu0
        %v684 = vpop.f32.mrb[0].mxu0
        %v685 = vadd.f32 %v401, %v684
        %v686 = vpop.f32.mrb[0].mxu0
        %687 = vmatprep.mubr.bf16.mxu0 0
        %688 = vmatmul.mubr.bf16.gmra.mrb[0].mxu0 %v539
        %v689 = vpop.f32.mrb[0].mxu0
        %v690 = vadd.f32 %v401, %v689
        %v691 = vpop.f32.mrb[0].mxu0
        %v692 = vpop.f32.mrb[0].mxu0
        %v693 = vadd.f32 %v401, %v692
        %v694 = vpop.f32.mrb[0].mxu0
        %695 = vmatprep.mubr.bf16.mxu0 0
        %696 = vmatmul.mubr.bf16.gmra.mrb[0].mxu0 %v542
        %v697 = vpop.f32.mrb[0].mxu0
        %v698 = vadd.f32 %v401, %v697
        %v699 = vpop.f32.mrb[0].mxu0
        %v700 = vpop.f32.mrb[0].mxu0
        %v701 = vadd.f32 %v401, %v700
        %v702 = vpop.f32.mrb[0].mxu0
        %703 = vmatprep.mubr.bf16.mxu0 0
        %704 = vmatmul.mubr.bf16.gmra.mrb[0].mxu0 %v545
        %v705 = vpop.f32.mrb[0].mxu0
        %v706 = vadd.f32 %v401, %v705
        %v707 = vpop.f32.mrb[0].mxu0
        %v708 = vpop.f32.mrb[0].mxu0
        %v709 = vadd.f32 %v401, %v708
        %v710 = vpop.f32.mrb[0].mxu0
        %711 = vdwg.mxu0
        %v712 = vsub.f32 0.0, %v586
        %v713 = vsub.f32 0.0, %v589
        %v714 = vsub.f32 0.0, %v594
        %v715 = vsub.f32 0.0, %v597
        %v716 = vsub.f32 0.0, %v602
        %v717 = vsub.f32 0.0, %v605
        %v718 = vsub.f32 0.0, %v610
        %v719 = vsub.f32 0.0, %v613
        %v720 = vsub.f32 0.0, %v618
        %v721 = vsub.f32 0.0, %v621
        %v722 = vsub.f32 0.0, %v626
        %v723 = vsub.f32 0.0, %v629
        %v724 = vsub.f32 0.0, %v634
        %v725 = vsub.f32 0.0, %v637
        %v726 = vsub.f32 0.0, %v642
        %v727 = vsub.f32 0.0, %v645
        %v728 = vsub.f32 0.0, %v650
        %v729 = vsub.f32 0.0, %v653
        %v730 = vsub.f32 0.0, %v658
        %v731 = vsub.f32 0.0, %v661
        %v732 = vsub.f32 0.0, %v666
        %v733 = vsub.f32 0.0, %v669
        %v734 = vsub.f32 0.0, %v674
        %v735 = vsub.f32 0.0, %v677
        %v736 = vsub.f32 0.0, %v682
        %v737 = vsub.f32 0.0, %v685
        %v738 = vsub.f32 0.0, %v690
        %v739 = vsub.f32 0.0, %v693
        %v740 = vsub.f32 0.0, %v698
        %v741 = vsub.f32 0.0, %v701
        %v742 = vsub.f32 0.0, %v706
        %v743 = vsub.f32 0.0, %v709
        %v744 = vmul.f32 %v712, 1.442695
        %v745 = vpow.pop %v744
        %v746 = vmul.f32 %v713, 1.442695
        %v747 = vpow.pop %v746
        %v748 = vmul.f32 %v714, 1.442695
        %v749 = vpow.pop %v748
        %v750 = vmul.f32 %v715, 1.442695
        %v751 = vpow.pop %v750
        %v752 = vmul.f32 %v716, 1.442695
        %v753 = vpow.pop %v752
        %v754 = vmul.f32 %v717, 1.442695
        %v755 = vpow.pop %v754
        %v756 = vmul.f32 %v718, 1.442695
        %v757 = vpow.pop %v756
        %v758 = vmul.f32 %v719, 1.442695
        %v759 = vpow.pop %v758
        %v760 = vmul.f32 %v720, 1.442695
        %v761 = vpow.pop %v760
        %v762 = vmul.f32 %v721, 1.442695
        %v763 = vpow.pop %v762
        %v764 = vmul.f32 %v722, 1.442695
        %v765 = vpow.pop %v764
        %v766 = vmul.f32 %v723, 1.442695
        %v767 = vpow.pop %v766
        %v768 = vmul.f32 %v724, 1.442695
        %v769 = vpow.pop %v768
        %v770 = vmul.f32 %v725, 1.442695
        %v771 = vpow.pop %v770
        %v772 = vmul.f32 %v726, 1.442695
        %v773 = vpow.pop %v772
        %v774 = vmul.f32 %v727, 1.442695
        %v775 = vpow.pop %v774
        %v776 = vmul.f32 %v728, 1.442695
        %v777 = vpow.pop %v776
        %v778 = vmul.f32 %v729, 1.442695
        %v779 = vpow.pop %v778
        %v780 = vmul.f32 %v730, 1.442695
        %v781 = vpow.pop %v780
        %v782 = vmul.f32 %v731, 1.442695
        %v783 = vpow.pop %v782
        %v784 = vmul.f32 %v732, 1.442695
        %v785 = vpow.pop %v784
        %v786 = vmul.f32 %v733, 1.442695
        %v787 = vpow.pop %v786
        %v788 = vmul.f32 %v734, 1.442695
        %v789 = vpow.pop %v788
        %v790 = vmul.f32 %v735, 1.442695
        %v791 = vpow.pop %v790
        %v792 = vmul.f32 %v736, 1.442695
        %v793 = vpow.pop %v792
        %v794 = vmul.f32 %v737, 1.442695
        %v795 = vpow.pop %v794
        %v796 = vmul.f32 %v738, 1.442695
        %v797 = vpow.pop %v796
        %v798 = vmul.f32 %v739, 1.442695
        %v799 = vpow.pop %v798
        %v800 = vmul.f32 %v740, 1.442695
        %v801 = vpow.pop %v800
        %v802 = vmul.f32 %v741, 1.442695
        %v803 = vpow.pop %v802
        %v804 = vmul.f32 %v742, 1.442695
        %v805 = vpow.pop %v804
        %v806 = vmul.f32 %v743, 1.442695
        %v807 = vpow.pop %v806
        %v808 = vadd.f32 %v745, 1.0
        %v809 = vadd.f32 %v747, 1.0
        %v810 = vadd.f32 %v749, 1.0
        %v811 = vadd.f32 %v751, 1.0
        %v812 = vadd.f32 %v753, 1.0
        %v813 = vadd.f32 %v755, 1.0
        %v814 = vadd.f32 %v757, 1.0
        %v815 = vadd.f32 %v759, 1.0
        %v816 = vadd.f32 %v761, 1.0
        %v817 = vadd.f32 %v763, 1.0
        %v818 = vadd.f32 %v765, 1.0
        %v819 = vadd.f32 %v767, 1.0
        %v820 = vadd.f32 %v769, 1.0
        %v821 = vadd.f32 %v771, 1.0
        %v822 = vadd.f32 %v773, 1.0
        %v823 = vadd.f32 %v775, 1.0
        %v824 = vadd.f32 %v777, 1.0
        %v825 = vadd.f32 %v779, 1.0
        %v826 = vadd.f32 %v781, 1.0
        %v827 = vadd.f32 %v783, 1.0
        %v828 = vadd.f32 %v785, 1.0
        %v829 = vadd.f32 %v787, 1.0
        %v830 = vadd.f32 %v789, 1.0
        %v831 = vadd.f32 %v791, 1.0
        %v832 = vadd.f32 %v793, 1.0
        %v833 = vadd.f32 %v795, 1.0
        %v834 = vadd.f32 %v797, 1.0
        %v835 = vadd.f32 %v799, 1.0
        %v836 = vadd.f32 %v801, 1.0
        %v837 = vadd.f32 %v803, 1.0
        %v838 = vadd.f32 %v805, 1.0
        %v839 = vadd.f32 %v807, 1.0
        %v840 = vrcp.pop %v808
        %v841 = vrcp.pop %v809
        %v842 = vrcp.pop %v810
        %v843 = vrcp.pop %v811
        %v844 = vrcp.pop %v812
        %v845 = vrcp.pop %v813
        %v846 = vrcp.pop %v814
        %v847 = vrcp.pop %v815
        %v848 = vrcp.pop %v816
        %v849 = vrcp.pop %v817
        %v850 = vrcp.pop %v818
        %v851 = vrcp.pop %v819
        %v852 = vrcp.pop %v820
        %v853 = vrcp.pop %v821
        %v854 = vrcp.pop %v822
        %v855 = vrcp.pop %v823
        %v856 = vrcp.pop %v824
        %v857 = vrcp.pop %v825
        %v858 = vrcp.pop %v826
        %v859 = vrcp.pop %v827
        %v860 = vrcp.pop %v828
        %v861 = vrcp.pop %v829
        %v862 = vrcp.pop %v830
        %v863 = vrcp.pop %v831
        %v864 = vrcp.pop %v832
        %v865 = vrcp.pop %v833
        %v866 = vrcp.pop %v834
        %v867 = vrcp.pop %v835
        %v868 = vrcp.pop %v836
        %v869 = vrcp.pop %v837
        %v870 = vrcp.pop %v838
        %v871 = vrcp.pop %v839
        %v872 = vmul.f32 %v586, %v840
        %v873 = vmul.f32 %v589, %v841
        %v874 = vmul.f32 %v594, %v842
        %v875 = vmul.f32 %v597, %v843
        %v876 = vmul.f32 %v602, %v844
        %v877 = vmul.f32 %v605, %v845
        %v878 = vmul.f32 %v610, %v846
        %v879 = vmul.f32 %v613, %v847
        %v880 = vmul.f32 %v618, %v848
        %v881 = vmul.f32 %v621, %v849
        %v882 = vmul.f32 %v626, %v850
        %v883 = vmul.f32 %v629, %v851
        %v884 = vmul.f32 %v634, %v852
        %v885 = vmul.f32 %v637, %v853
        %v886 = vmul.f32 %v642, %v854
        %v887 = vmul.f32 %v645, %v855
        %v888 = vmul.f32 %v650, %v856
        %v889 = vmul.f32 %v653, %v857
        %v890 = vmul.f32 %v658, %v858
        %v891 = vmul.f32 %v661, %v859
        %v892 = vmul.f32 %v666, %v860
        %v893 = vmul.f32 %v669, %v861
        %v894 = vmul.f32 %v674, %v862
        %v895 = vmul.f32 %v677, %v863
        %v896 = vmul.f32 %v682, %v864
        %v897 = vmul.f32 %v685, %v865
        %v898 = vmul.f32 %v690, %v866
        %v899 = vmul.f32 %v693, %v867
        %v900 = vmul.f32 %v698, %v868
        %v901 = vmul.f32 %v701, %v869
        %v902 = vmul.f32 %v706, %v870
        %v903 = vmul.f32 %v709, %v871
        %v904 = vpack.c.bf16 %v873, %v872
        %v905 = vpack.c.bf16 %v875, %v874
        %v906 = vpack.c.bf16 %v877, %v876
        %v907 = vpack.c.bf16 %v879, %v878
        %v908 = vpack.c.bf16 %v881, %v880
        %v909 = vpack.c.bf16 %v883, %v882
        %v910 = vpack.c.bf16 %v885, %v884
        %v911 = vpack.c.bf16 %v887, %v886
        %v912 = vpack.c.bf16 %v889, %v888
        %v913 = vpack.c.bf16 %v891, %v890
        %v914 = vpack.c.bf16 %v893, %v892
        %v915 = vpack.c.bf16 %v895, %v894
        %v916 = vpack.c.bf16 %v897, %v896
        %v917 = vpack.c.bf16 %v899, %v898
        %v918 = vpack.c.bf16 %v901, %v900
        %v919 = vpack.c.bf16 %v903, %v902
        %v920 = vld [vmem:[%s3] sm:$0xf]
        %v921 = vld [vmem:[%s3 + $0x4] sm:$0xf]
        %v922 = vld [vmem:[%s3 + $0x8] sm:$0xf]
        %v923 = vld [vmem:[%s3 + $0xc] sm:$0xf]
        %v924 = vld [vmem:[%s4] sm:$0x1]
        %v926 = vlaneseq
        %v927 = vshrl.u32 %v926, 7
        %v928 = vsub.s32 0, %v927
        %v929 = vrot.slane %v924, %v928
        %v935 = vunpack.c.l.b16 %v920
        %v936 = vunpack.c.l.b16 %v921
        %v937 = vunpack.c.l.b16 %v922
        %v938 = vunpack.c.l.b16 %v923
        %v939 = vpack.c.b16 %v936, %v935
        %v940 = vpack.c.b16 %v938, %v937
        %vm943 = vcmask 261120
        %v945 = vsel %vm943, %v904, 0
        %v948 = vsel %vm943, %v905, 0
        %v951 = vsel %vm943, %v906, 0
        %v954 = vsel %vm943, %v907, 0
        %v957 = vsel %vm943, %v908, 0
        %v960 = vsel %vm943, %v909, 0
        %v963 = vsel %vm943, %v910, 0
        %v966 = vsel %vm943, %v911, 0
        %v969 = vsel %vm943, %v912, 0
        %v972 = vsel %vm943, %v913, 0
        %v975 = vsel %vm943, %v914, 0
        %v978 = vsel %vm943, %v915, 0
        %v981 = vsel %vm943, %v916, 0
        %v984 = vsel %vm943, %v917, 0
        %v987 = vsel %vm943, %v918, 0
        %v990 = vsel %vm943, %v919, 0
        %992 = vmatprep.subr.bf16.mxu0 0
        %993 = vmatpush1.bf16.msra.mxu0 %v939
        %994 = vmatprep.subr.bf16.mxu0 0
        %995 = vmatpush1.bf16.msra.mxu0 %v940
        %996 = vmatprep.subr.bf16.mxu0 0
        %997 = vmatpush1.bf16.msra.mxu0 0
        %998 = vmatprep.subr.bf16.mxu0 0
        %999 = vmatpush1.bf16.msra.mxu0 0
        %1000 = vmatprep.subr.bf16.mxu0 0
        %1001 = vmatpush1.bf16.msra.mxu0 0
        %1002 = vmatprep.subr.bf16.mxu0 0
        %1003 = vmatpush1.bf16.msra.mxu0 0
        %1004 = vmatprep.subr.bf16.mxu0 0
        %1005 = vmatpush1.bf16.msra.mxu0 0
        %1006 = vmatprep.subr.bf16.mxu0 0
        %1007 = vmatpush1.bf16.msra.mxu0 0
        %1008 = vmatprep.subr.bf16.mxu0 0
        %1009 = vmatpush1.bf16.msra.mxu0 0
        %1010 = vmatprep.subr.bf16.mxu0 0
        %1011 = vmatpush1.bf16.msra.mxu0 0
        %1012 = vmatprep.subr.bf16.mxu0 0
        %1013 = vmatpush1.bf16.msra.mxu0 0
        %1014 = vmatprep.subr.bf16.mxu0 0
        %1015 = vmatpush1.bf16.msra.mxu0 0
        %1016 = vmatprep.subr.bf16.mxu0 0
        %1017 = vmatpush1.bf16.msra.mxu0 0
        %1018 = vmatprep.subr.bf16.mxu0 0
        %1019 = vmatpush1.bf16.msra.mxu0 0
        %1020 = vmatprep.subr.bf16.mxu0 0
        %1021 = vmatpush1.bf16.msra.mxu0 0
        %1022 = vmatprep.subr.bf16.mxu0 0
        %1023 = vmatpush1.bf16.msra.mxu0 0
        %1024 = vmatprep.mubr.bf16.mxu0 0
        %1025 = vmatmul.mubr.bf16.gmra.mrb[0].mxu0 %v945
        %v1026 = vpop.f32.mrb[0].mxu0
        %v1027 = vadd.f32 %v929, %v1026
        %v1028 = vpop.f32.mrb[0].mxu0
        %v1029 = vpop.f32.mrb[0].mxu0
        %v1030 = vadd.f32 %v929, %v1029
        %v1031 = vpop.f32.mrb[0].mxu0
        %1032 = vmatprep.mubr.bf16.mxu0 0
        %1033 = vmatmul.mubr.bf16.gmra.mrb[0].mxu0 %v948
        %v1034 = vpop.f32.mrb[0].mxu0
        %v1035 = vadd.f32 %v929, %v1034
        %v1036 = vpop.f32.mrb[0].mxu0
        %v1037 = vpop.f32.mrb[0].mxu0
        %v1038 = vadd.f32 %v929, %v1037
        %v1039 = vpop.f32.mrb[0].mxu0
        %1040 = vmatprep.mubr.bf16.mxu0 0
        %1041 = vmatmul.mubr.bf16.gmra.mrb[0].mxu0 %v951
        %v1042 = vpop.f32.mrb[0].mxu0
        %v1043 = vadd.f32 %v929, %v1042
        %v1044 = vpop.f32.mrb[0].mxu0
        %v1045 = vpop.f32.mrb[0].mxu0
        %v1046 = vadd.f32 %v929, %v1045
        %v1047 = vpop.f32.mrb[0].mxu0
        %1048 = vmatprep.mubr.bf16.mxu0 0
        %1049 = vmatmul.mubr.bf16.gmra.mrb[0].mxu0 %v954
        %v1050 = vpop.f32.mrb[0].mxu0
        %v1051 = vadd.f32 %v929, %v1050
        %v1052 = vpop.f32.mrb[0].mxu0
        %v1053 = vpop.f32.mrb[0].mxu0
        %v1054 = vadd.f32 %v929, %v1053
        %v1055 = vpop.f32.mrb[0].mxu0
        %1056 = vmatprep.mubr.bf16.mxu0 0
        %1057 = vmatmul.mubr.bf16.gmra.mrb[0].mxu0 %v957
        %v1058 = vpop.f32.mrb[0].mxu0
        %v1059 = vadd.f32 %v929, %v1058
        %v1060 = vpop.f32.mrb[0].mxu0
        %v1061 = vpop.f32.mrb[0].mxu0
        %v1062 = vadd.f32 %v929, %v1061
        %v1063 = vpop.f32.mrb[0].mxu0
        %1064 = vmatprep.mubr.bf16.mxu0 0
        %1065 = vmatmul.mubr.bf16.gmra.mrb[0].mxu0 %v960
        %v1066 = vpop.f32.mrb[0].mxu0
        %v1067 = vadd.f32 %v929, %v1066
        %v1068 = vpop.f32.mrb[0].mxu0
        %v1069 = vpop.f32.mrb[0].mxu0
        %v1070 = vadd.f32 %v929, %v1069
        %v1071 = vpop.f32.mrb[0].mxu0
        %1072 = vmatprep.mubr.bf16.mxu0 0
        %1073 = vmatmul.mubr.bf16.gmra.mrb[0].mxu0 %v963
        %v1074 = vpop.f32.mrb[0].mxu0
        %v1075 = vadd.f32 %v929, %v1074
        %v1076 = vpop.f32.mrb[0].mxu0
        %v1077 = vpop.f32.mrb[0].mxu0
        %v1078 = vadd.f32 %v929, %v1077
        %v1079 = vpop.f32.mrb[0].mxu0
        %1080 = vmatprep.mubr.bf16.mxu0 0
        %1081 = vmatmul.mubr.bf16.gmra.mrb[0].mxu0 %v966
        %v1082 = vpop.f32.mrb[0].mxu0
        %v1083 = vadd.f32 %v929, %v1082
        %v1084 = vpop.f32.mrb[0].mxu0
        %v1085 = vpop.f32.mrb[0].mxu0
        %v1086 = vadd.f32 %v929, %v1085
        %v1087 = vpop.f32.mrb[0].mxu0
        %1088 = vmatprep.mubr.bf16.mxu0 0
        %1089 = vmatmul.mubr.bf16.gmra.mrb[0].mxu0 %v969
        %v1090 = vpop.f32.mrb[0].mxu0
        %v1091 = vadd.f32 %v929, %v1090
        %v1092 = vpop.f32.mrb[0].mxu0
        %v1093 = vpop.f32.mrb[0].mxu0
        %v1094 = vadd.f32 %v929, %v1093
        %v1095 = vpop.f32.mrb[0].mxu0
        %1096 = vmatprep.mubr.bf16.mxu0 0
        %1097 = vmatmul.mubr.bf16.gmra.mrb[0].mxu0 %v972
        %v1098 = vpop.f32.mrb[0].mxu0
        %v1099 = vadd.f32 %v929, %v1098
        %v1100 = vpop.f32.mrb[0].mxu0
        %v1101 = vpop.f32.mrb[0].mxu0
        %v1102 = vadd.f32 %v929, %v1101
        %v1103 = vpop.f32.mrb[0].mxu0
        %1104 = vmatprep.mubr.bf16.mxu0 0
        %1105 = vmatmul.mubr.bf16.gmra.mrb[0].mxu0 %v975
        %v1106 = vpop.f32.mrb[0].mxu0
        %v1107 = vadd.f32 %v929, %v1106
        %v1108 = vpop.f32.mrb[0].mxu0
        %v1109 = vpop.f32.mrb[0].mxu0
        %v1110 = vadd.f32 %v929, %v1109
        %v1111 = vpop.f32.mrb[0].mxu0
        %1112 = vmatprep.mubr.bf16.mxu0 0
        %1113 = vmatmul.mubr.bf16.gmra.mrb[0].mxu0 %v978
        %v1114 = vpop.f32.mrb[0].mxu0
        %v1115 = vadd.f32 %v929, %v1114
        %v1116 = vpop.f32.mrb[0].mxu0
        %v1117 = vpop.f32.mrb[0].mxu0
        %v1118 = vadd.f32 %v929, %v1117
        %v1119 = vpop.f32.mrb[0].mxu0
        %1120 = vmatprep.mubr.bf16.mxu0 0
        %1121 = vmatmul.mubr.bf16.gmra.mrb[0].mxu0 %v981
        %v1122 = vpop.f32.mrb[0].mxu0
        %v1123 = vadd.f32 %v929, %v1122
        %v1124 = vpop.f32.mrb[0].mxu0
        %v1125 = vpop.f32.mrb[0].mxu0
        %v1126 = vadd.f32 %v929, %v1125
        %v1127 = vpop.f32.mrb[0].mxu0
        %1128 = vmatprep.mubr.bf16.mxu0 0
        %1129 = vmatmul.mubr.bf16.gmra.mrb[0].mxu0 %v984
        %v1130 = vpop.f32.mrb[0].mxu0
        %v1131 = vadd.f32 %v929, %v1130
        %v1132 = vpop.f32.mrb[0].mxu0
        %v1133 = vpop.f32.mrb[0].mxu0
        %v1134 = vadd.f32 %v929, %v1133
        %v1135 = vpop.f32.mrb[0].mxu0
        %1136 = vmatprep.mubr.bf16.mxu0 0
        %1137 = vmatmul.mubr.bf16.gmra.mrb[0].mxu0 %v987
        %v1138 = vpop.f32.mrb[0].mxu0
        %v1139 = vadd.f32 %v929, %v1138
        %v1140 = vpop.f32.mrb[0].mxu0
        %v1141 = vpop.f32.mrb[0].mxu0
        %v1142 = vadd.f32 %v929, %v1141
        %v1143 = vpop.f32.mrb[0].mxu0
        %1144 = vmatprep.mubr.bf16.mxu0 0
        %1145 = vmatmul.mubr.bf16.gmra.mrb[0].mxu0 %v990
        %v1146 = vpop.f32.mrb[0].mxu0
        %v1147 = vadd.f32 %v929, %v1146
        %v1148 = vpop.f32.mrb[0].mxu0
        %v1149 = vpop.f32.mrb[0].mxu0
        %v1150 = vadd.f32 %v929, %v1149
        %v1151 = vpop.f32.mrb[0].mxu0
        %1152 = vdwg.mxu0
        %v1153 = vsub.f32 0.0, %v1027
        %v1154 = vsub.f32 0.0, %v1030
        %v1155 = vsub.f32 0.0, %v1035
        %v1156 = vsub.f32 0.0, %v1038
        %v1157 = vsub.f32 0.0, %v1043
        %v1158 = vsub.f32 0.0, %v1046
        %v1159 = vsub.f32 0.0, %v1051
        %v1160 = vsub.f32 0.0, %v1054
        %v1161 = vsub.f32 0.0, %v1059
        %v1162 = vsub.f32 0.0, %v1062
        %v1163 = vsub.f32 0.0, %v1067
        %v1164 = vsub.f32 0.0, %v1070
        %v1165 = vsub.f32 0.0, %v1075
        %v1166 = vsub.f32 0.0, %v1078
        %v1167 = vsub.f32 0.0, %v1083
        %v1168 = vsub.f32 0.0, %v1086
        %v1169 = vsub.f32 0.0, %v1091
        %v1170 = vsub.f32 0.0, %v1094
        %v1171 = vsub.f32 0.0, %v1099
        %v1172 = vsub.f32 0.0, %v1102
        %v1173 = vsub.f32 0.0, %v1107
        %v1174 = vsub.f32 0.0, %v1110
        %v1175 = vsub.f32 0.0, %v1115
        %v1176 = vsub.f32 0.0, %v1118
        %v1177 = vsub.f32 0.0, %v1123
        %v1178 = vsub.f32 0.0, %v1126
        %v1179 = vsub.f32 0.0, %v1131
        %v1180 = vsub.f32 0.0, %v1134
        %v1181 = vsub.f32 0.0, %v1139
        %v1182 = vsub.f32 0.0, %v1142
        %v1183 = vsub.f32 0.0, %v1147
        %v1184 = vsub.f32 0.0, %v1150
        %v1185 = vmul.f32 %v1153, 1.442695
        %v1186 = vpow.pop %v1185
        %v1187 = vmul.f32 %v1154, 1.442695
        %v1188 = vpow.pop %v1187
        %v1189 = vmul.f32 %v1155, 1.442695
        %v1190 = vpow.pop %v1189
        %v1191 = vmul.f32 %v1156, 1.442695
        %v1192 = vpow.pop %v1191
        %v1193 = vmul.f32 %v1157, 1.442695
        %v1194 = vpow.pop %v1193
        %v1195 = vmul.f32 %v1158, 1.442695
        %v1196 = vpow.pop %v1195
        %v1197 = vmul.f32 %v1159, 1.442695
        %v1198 = vpow.pop %v1197
        %v1199 = vmul.f32 %v1160, 1.442695
        %v1200 = vpow.pop %v1199
        %v1201 = vmul.f32 %v1161, 1.442695
        %v1202 = vpow.pop %v1201
        %v1203 = vmul.f32 %v1162, 1.442695
        %v1204 = vpow.pop %v1203
        %v1205 = vmul.f32 %v1163, 1.442695
        %v1206 = vpow.pop %v1205
        %v1207 = vmul.f32 %v1164, 1.442695
        %v1208 = vpow.pop %v1207
        %v1209 = vmul.f32 %v1165, 1.442695
        %v1210 = vpow.pop %v1209
        %v1211 = vmul.f32 %v1166, 1.442695
        %v1212 = vpow.pop %v1211
        %v1213 = vmul.f32 %v1167, 1.442695
        %v1214 = vpow.pop %v1213
        %v1215 = vmul.f32 %v1168, 1.442695
        %v1216 = vpow.pop %v1215
        %v1217 = vmul.f32 %v1169, 1.442695
        %v1218 = vpow.pop %v1217
        %v1219 = vmul.f32 %v1170, 1.442695
        %v1220 = vpow.pop %v1219
        %v1221 = vmul.f32 %v1171, 1.442695
        %v1222 = vpow.pop %v1221
        %v1223 = vmul.f32 %v1172, 1.442695
        %v1224 = vpow.pop %v1223
        %v1225 = vmul.f32 %v1173, 1.442695
        %v1226 = vpow.pop %v1225
        %v1227 = vmul.f32 %v1174, 1.442695
        %v1228 = vpow.pop %v1227
        %v1229 = vmul.f32 %v1175, 1.442695
        %v1230 = vpow.pop %v1229
        %v1231 = vmul.f32 %v1176, 1.442695
        %v1232 = vpow.pop %v1231
        %v1233 = vmul.f32 %v1177, 1.442695
        %v1234 = vpow.pop %v1233
        %v1235 = vmul.f32 %v1178, 1.442695
        %v1236 = vpow.pop %v1235
        %v1237 = vmul.f32 %v1179, 1.442695
        %v1238 = vpow.pop %v1237
        %v1239 = vmul.f32 %v1180, 1.442695
        %v1240 = vpow.pop %v1239
        %v1241 = vmul.f32 %v1181, 1.442695
        %v1242 = vpow.pop %v1241
        %v1243 = vmul.f32 %v1182, 1.442695
        %v1244 = vpow.pop %v1243
        %v1245 = vmul.f32 %v1183, 1.442695
        %v1246 = vpow.pop %v1245
        %v1247 = vmul.f32 %v1184, 1.442695
        %v1248 = vpow.pop %v1247
        %v1249 = vadd.f32 %v1186, 1.0
        %v1250 = vadd.f32 %v1188, 1.0
        %v1251 = vadd.f32 %v1190, 1.0
        %v1252 = vadd.f32 %v1192, 1.0
        %v1253 = vadd.f32 %v1194, 1.0
        %v1254 = vadd.f32 %v1196, 1.0
        %v1255 = vadd.f32 %v1198, 1.0
        %v1256 = vadd.f32 %v1200, 1.0
        %v1257 = vadd.f32 %v1202, 1.0
        %v1258 = vadd.f32 %v1204, 1.0
        %v1259 = vadd.f32 %v1206, 1.0
        %v1260 = vadd.f32 %v1208, 1.0
        %v1261 = vadd.f32 %v1210, 1.0
        %v1262 = vadd.f32 %v1212, 1.0
        %v1263 = vadd.f32 %v1214, 1.0
        %v1264 = vadd.f32 %v1216, 1.0
        %v1265 = vadd.f32 %v1218, 1.0
        %v1266 = vadd.f32 %v1220, 1.0
        %v1267 = vadd.f32 %v1222, 1.0
        %v1268 = vadd.f32 %v1224, 1.0
        %v1269 = vadd.f32 %v1226, 1.0
        %v1270 = vadd.f32 %v1228, 1.0
        %v1271 = vadd.f32 %v1230, 1.0
        %v1272 = vadd.f32 %v1232, 1.0
        %v1273 = vadd.f32 %v1234, 1.0
        %v1274 = vadd.f32 %v1236, 1.0
        %v1275 = vadd.f32 %v1238, 1.0
        %v1276 = vadd.f32 %v1240, 1.0
        %v1277 = vadd.f32 %v1242, 1.0
        %v1278 = vadd.f32 %v1244, 1.0
        %v1279 = vadd.f32 %v1246, 1.0
        %v1280 = vadd.f32 %v1248, 1.0
        %v1281 = vrcp.pop %v1249
        %v1282 = vrcp.pop %v1250
        %v1283 = vrcp.pop %v1251
        %v1284 = vrcp.pop %v1252
        %v1285 = vrcp.pop %v1253
        %v1286 = vrcp.pop %v1254
        %v1287 = vrcp.pop %v1255
        %v1288 = vrcp.pop %v1256
        %v1289 = vrcp.pop %v1257
        %v1290 = vrcp.pop %v1258
        %v1291 = vrcp.pop %v1259
        %v1292 = vrcp.pop %v1260
        %v1293 = vrcp.pop %v1261
        %v1294 = vrcp.pop %v1262
        %v1295 = vrcp.pop %v1263
        %v1296 = vrcp.pop %v1264
        %v1297 = vrcp.pop %v1265
        %v1298 = vrcp.pop %v1266
        %v1299 = vrcp.pop %v1267
        %v1300 = vrcp.pop %v1268
        %v1301 = vrcp.pop %v1269
        %v1302 = vrcp.pop %v1270
        %v1303 = vrcp.pop %v1271
        %v1304 = vrcp.pop %v1272
        %v1305 = vrcp.pop %v1273
        %v1306 = vrcp.pop %v1274
        %v1307 = vrcp.pop %v1275
        %v1308 = vrcp.pop %v1276
        %v1309 = vrcp.pop %v1277
        %v1310 = vrcp.pop %v1278
        %v1311 = vrcp.pop %v1279
        %v1312 = vrcp.pop %v1280
        %v1313 = vmul.f32 %v1027, %v1281
        %v1314 = vmul.f32 %v1030, %v1282
        %v1315 = vmul.f32 %v1035, %v1283
        %v1316 = vmul.f32 %v1038, %v1284
        %v1317 = vmul.f32 %v1043, %v1285
        %v1318 = vmul.f32 %v1046, %v1286
        %v1319 = vmul.f32 %v1051, %v1287
        %v1320 = vmul.f32 %v1054, %v1288
        %v1321 = vmul.f32 %v1059, %v1289
        %v1322 = vmul.f32 %v1062, %v1290
        %v1323 = vmul.f32 %v1067, %v1291
        %v1324 = vmul.f32 %v1070, %v1292
        %v1325 = vmul.f32 %v1075, %v1293
        %v1326 = vmul.f32 %v1078, %v1294
        %v1327 = vmul.f32 %v1083, %v1295
        %v1328 = vmul.f32 %v1086, %v1296
        %v1329 = vmul.f32 %v1091, %v1297
        %v1330 = vmul.f32 %v1094, %v1298
        %v1331 = vmul.f32 %v1099, %v1299
        %v1332 = vmul.f32 %v1102, %v1300
        %v1333 = vmul.f32 %v1107, %v1301
        %v1334 = vmul.f32 %v1110, %v1302
        %v1335 = vmul.f32 %v1115, %v1303
        %v1336 = vmul.f32 %v1118, %v1304
        %v1337 = vmul.f32 %v1123, %v1305
        %v1338 = vmul.f32 %v1126, %v1306
        %v1339 = vmul.f32 %v1131, %v1307
        %v1340 = vmul.f32 %v1134, %v1308
        %v1341 = vmul.f32 %v1139, %v1309
        %v1342 = vmul.f32 %v1142, %v1310
        %v1343 = vmul.f32 %v1147, %v1311
        %v1344 = vmul.f32 %v1150, %v1312
        %s1345 = sld [smem:[#allocation2]]
        %v1346 = vmax.f32 %v1313, 1e-06
        %v1347 = vmax.f32 %v1314, 1e-06
        %v1348 = vmax.f32 %v1315, 1e-06
        %v1349 = vmax.f32 %v1316, 1e-06
        %v1350 = vmax.f32 %v1317, 1e-06
        %v1351 = vmax.f32 %v1318, 1e-06
        %v1352 = vmax.f32 %v1319, 1e-06
        %v1353 = vmax.f32 %v1320, 1e-06
        %v1354 = vmax.f32 %v1321, 1e-06
        %v1355 = vmax.f32 %v1322, 1e-06
        %v1356 = vmax.f32 %v1323, 1e-06
        %v1357 = vmax.f32 %v1324, 1e-06
        %v1358 = vmax.f32 %v1325, 1e-06
        %v1359 = vmax.f32 %v1326, 1e-06
        %v1360 = vmax.f32 %v1327, 1e-06
        %v1361 = vmax.f32 %v1328, 1e-06
        %v1362 = vmax.f32 %v1329, 1e-06
        %v1363 = vmax.f32 %v1330, 1e-06
        %v1364 = vmax.f32 %v1331, 1e-06
        %v1365 = vmax.f32 %v1332, 1e-06
        %v1366 = vmax.f32 %v1333, 1e-06
        %v1367 = vmax.f32 %v1334, 1e-06
        %v1368 = vmax.f32 %v1335, 1e-06
        %v1369 = vmax.f32 %v1336, 1e-06
        %v1370 = vmax.f32 %v1337, 1e-06
        %v1371 = vmax.f32 %v1338, 1e-06
        %v1372 = vmax.f32 %v1339, 1e-06
        %v1373 = vmax.f32 %v1340, 1e-06
        %v1374 = vmax.f32 %v1341, 1e-06
        %v1375 = vmax.f32 %v1342, 1e-06
        %v1376 = vmax.f32 %v1343, 1e-06
        %v1377 = vmax.f32 %v1344, 1e-06
        %v1378 = vlog2.pop %v1346
        %v1379 = vmul.f32 %v1378, 0.6931472
        %v1380 = vlog2.pop %v1347
        %v1381 = vmul.f32 %v1380, 0.6931472
        %v1382 = vlog2.pop %v1348
        %v1383 = vmul.f32 %v1382, 0.6931472
        %v1384 = vlog2.pop %v1349
        %v1385 = vmul.f32 %v1384, 0.6931472
        %v1386 = vlog2.pop %v1350
        %v1387 = vmul.f32 %v1386, 0.6931472
        %v1388 = vlog2.pop %v1351
        %v1389 = vmul.f32 %v1388, 0.6931472
        %v1390 = vlog2.pop %v1352
        %v1391 = vmul.f32 %v1390, 0.6931472
        %v1392 = vlog2.pop %v1353
        %v1393 = vmul.f32 %v1392, 0.6931472
        %v1394 = vlog2.pop %v1354
        %v1395 = vmul.f32 %v1394, 0.6931472
        %v1396 = vlog2.pop %v1355
        %v1397 = vmul.f32 %v1396, 0.6931472
        %v1398 = vlog2.pop %v1356
        %v1399 = vmul.f32 %v1398, 0.6931472
        %v1400 = vlog2.pop %v1357
        %v1401 = vmul.f32 %v1400, 0.6931472
        %v1402 = vlog2.pop %v1358
        %v1403 = vmul.f32 %v1402, 0.6931472
        %v1404 = vlog2.pop %v1359
        %v1405 = vmul.f32 %v1404, 0.6931472
        %v1406 = vlog2.pop %v1360
        %v1407 = vmul.f32 %v1406, 0.6931472
        %v1408 = vlog2.pop %v1361
        %v1409 = vmul.f32 %v1408, 0.6931472
        %v1410 = vlog2.pop %v1362
        %v1411 = vmul.f32 %v1410, 0.6931472
        %v1412 = vlog2.pop %v1363
        %v1413 = vmul.f32 %v1412, 0.6931472
        %v1414 = vlog2.pop %v1364
        %v1415 = vmul.f32 %v1414, 0.6931472
        %v1416 = vlog2.pop %v1365
        %v1417 = vmul.f32 %v1416, 0.6931472
        %v1418 = vlog2.pop %v1366
        %v1419 = vmul.f32 %v1418, 0.6931472
        %v1420 = vlog2.pop %v1367
        %v1421 = vmul.f32 %v1420, 0.6931472
        %v1422 = vlog2.pop %v1368
        %v1423 = vmul.f32 %v1422, 0.6931472
        %v1424 = vlog2.pop %v1369
        %v1425 = vmul.f32 %v1424, 0.6931472
        %v1426 = vlog2.pop %v1370
        %v1427 = vmul.f32 %v1426, 0.6931472
        %v1428 = vlog2.pop %v1371
        %v1429 = vmul.f32 %v1428, 0.6931472
        %v1430 = vlog2.pop %v1372
        %v1431 = vmul.f32 %v1430, 0.6931472
        %v1432 = vlog2.pop %v1373
        %v1433 = vmul.f32 %v1432, 0.6931472
        %v1434 = vlog2.pop %v1374
        %v1435 = vmul.f32 %v1434, 0.6931472
        %v1436 = vlog2.pop %v1375
        %v1437 = vmul.f32 %v1436, 0.6931472
        %v1438 = vlog2.pop %v1376
        %v1439 = vmul.f32 %v1438, 0.6931472
        %v1440 = vlog2.pop %v1377
        %v1441 = vmul.f32 %v1440, 0.6931472
        %v1442 = vstv %s1345
        %v1443 = vmul.f32 %v1442, %v1379
        %v1444 = vmul.f32 %v1442, %v1381
        %v1445 = vmul.f32 %v1442, %v1383
        %v1446 = vmul.f32 %v1442, %v1385
        %v1447 = vmul.f32 %v1442, %v1387
        %v1448 = vmul.f32 %v1442, %v1389
        %v1449 = vmul.f32 %v1442, %v1391
        %v1450 = vmul.f32 %v1442, %v1393
        %v1451 = vmul.f32 %v1442, %v1395
        %v1452 = vmul.f32 %v1442, %v1397
        %v1453 = vmul.f32 %v1442, %v1399
        %v1454 = vmul.f32 %v1442, %v1401
        %v1455 = vmul.f32 %v1442, %v1403
        %v1456 = vmul.f32 %v1442, %v1405
        %v1457 = vmul.f32 %v1442, %v1407
        %v1458 = vmul.f32 %v1442, %v1409
        %v1459 = vmul.f32 %v1442, %v1411
        %v1460 = vmul.f32 %v1442, %v1413
        %v1461 = vmul.f32 %v1442, %v1415
        %v1462 = vmul.f32 %v1442, %v1417
        %v1463 = vmul.f32 %v1442, %v1419
        %v1464 = vmul.f32 %v1442, %v1421
        %v1465 = vmul.f32 %v1442, %v1423
        %v1466 = vmul.f32 %v1442, %v1425
        %v1467 = vmul.f32 %v1442, %v1427
        %v1468 = vmul.f32 %v1442, %v1429
        %v1469 = vmul.f32 %v1442, %v1431
        %v1470 = vmul.f32 %v1442, %v1433
        %v1471 = vmul.f32 %v1442, %v1435
        %v1472 = vmul.f32 %v1442, %v1437
        %v1473 = vmul.f32 %v1442, %v1439
        %v1474 = vmul.f32 %v1442, %v1441
        %v1475 = vmul.f32 %v1443, 1.442695
        %v1476 = vpow.pop %v1475
        %v1477 = vmul.f32 %v1444, 1.442695
        %v1478 = vpow.pop %v1477
        %v1479 = vmul.f32 %v1445, 1.442695
        %v1480 = vpow.pop %v1479
        %v1481 = vmul.f32 %v1446, 1.442695
        %v1482 = vpow.pop %v1481
        %v1483 = vmul.f32 %v1447, 1.442695
        %v1484 = vpow.pop %v1483
        %v1485 = vmul.f32 %v1448, 1.442695
        %v1486 = vpow.pop %v1485
        %v1487 = vmul.f32 %v1449, 1.442695
        %v1488 = vpow.pop %v1487
        %v1489 = vmul.f32 %v1450, 1.442695
        %v1490 = vpow.pop %v1489
        %v1491 = vmul.f32 %v1451, 1.442695
        %v1492 = vpow.pop %v1491
        %v1493 = vmul.f32 %v1452, 1.442695
        %v1494 = vpow.pop %v1493
        %v1495 = vmul.f32 %v1453, 1.442695
        %v1496 = vpow.pop %v1495
        %v1497 = vmul.f32 %v1454, 1.442695
        %v1498 = vpow.pop %v1497
        %v1499 = vmul.f32 %v1455, 1.442695
        %v1500 = vpow.pop %v1499
        %v1501 = vmul.f32 %v1456, 1.442695
        %v1502 = vpow.pop %v1501
        %v1503 = vmul.f32 %v1457, 1.442695
        %v1504 = vpow.pop %v1503
        %v1505 = vmul.f32 %v1458, 1.442695
        %v1506 = vpow.pop %v1505
        %v1507 = vmul.f32 %v1459, 1.442695
        %v1508 = vpow.pop %v1507
        %v1509 = vmul.f32 %v1460, 1.442695
        %v1510 = vpow.pop %v1509
        %v1511 = vmul.f32 %v1461, 1.442695
        %v1512 = vpow.pop %v1511
        %v1513 = vmul.f32 %v1462, 1.442695
        %v1514 = vpow.pop %v1513
        %v1515 = vmul.f32 %v1463, 1.442695
        %v1516 = vpow.pop %v1515
        %v1517 = vmul.f32 %v1464, 1.442695
        %v1518 = vpow.pop %v1517
        %v1519 = vmul.f32 %v1465, 1.442695
        %v1520 = vpow.pop %v1519
        %v1521 = vmul.f32 %v1466, 1.442695
        %v1522 = vpow.pop %v1521
        %v1523 = vmul.f32 %v1467, 1.442695
        %v1524 = vpow.pop %v1523
        %v1525 = vmul.f32 %v1468, 1.442695
        %v1526 = vpow.pop %v1525
        %v1527 = vmul.f32 %v1469, 1.442695
        %v1528 = vpow.pop %v1527
        %v1529 = vmul.f32 %v1470, 1.442695
        %v1530 = vpow.pop %v1529
        %v1531 = vmul.f32 %v1471, 1.442695
        %v1532 = vpow.pop %v1531
        %v1533 = vmul.f32 %v1472, 1.442695
        %v1534 = vpow.pop %v1533
        %v1535 = vmul.f32 %v1473, 1.442695
        %v1536 = vpow.pop %v1535
        %v1537 = vmul.f32 %v1474, 1.442695
        %v1538 = vpow.pop %v1537
        %1539 = vmatprep.subr.mxu0 0.0
        %1540 = vmatpush1.msra.mxu0 %v1476
        %1541 = vmatprep.subr.mxu0 0.0
        %1542 = vmatpush1.msra.mxu0 %v1478
        %1543 = vmatprep.subr.mxu0 0.0
        %1544 = vmatpush1.msra.mxu0 %v1480
        %1545 = vmatprep.subr.mxu0 0.0
        %1546 = vmatpush1.msra.mxu0 %v1482
        %1547 = vmatprep.subr.mxu0 0.0
        %1548 = vmatpush1.msra.mxu0 %v1484
        %1549 = vmatprep.subr.mxu0 0.0
        %1550 = vmatpush1.msra.mxu0 %v1486
        %1551 = vmatprep.subr.mxu0 0.0
        %1552 = vmatpush1.msra.mxu0 %v1488
        %1553 = vmatprep.subr.mxu0 0.0
        %1554 = vmatpush1.msra.mxu0 %v1490
        %1555 = vmatprep.subr.mxu0 0.0
        %1556 = vmatpush1.msra.mxu0 %v1492
        %1557 = vmatprep.subr.mxu0 0.0
        %1558 = vmatpush1.msra.mxu0 %v1494
        %1559 = vmatprep.subr.mxu0 0.0
        %1560 = vmatpush1.msra.mxu0 %v1496
        %1561 = vmatprep.subr.mxu0 0.0
        %1562 = vmatpush1.msra.mxu0 %v1498
        %1563 = vmatprep.subr.mxu0 0.0
        %1564 = vmatpush1.msra.mxu0 %v1500
        %1565 = vmatprep.subr.mxu0 0.0
        %1566 = vmatpush1.msra.mxu0 %v1502
        %1567 = vmatprep.subr.mxu0 0.0
        %1568 = vmatpush1.msra.mxu0 %v1504
        %1569 = vmatprep.subr.mxu0 0.0
        %1570 = vmatpush1.msra.mxu0 %v1506
        %1571 = vmatprep.subr.mxu0 0.0
        %1572 = vmatpush1.msra.mxu0 %v1508
        %1573 = vmatprep.subr.mxu0 0.0
        %1574 = vmatpush1.msra.mxu0 %v1510
        %1575 = vmatprep.subr.mxu0 0.0
        %1576 = vmatpush1.msra.mxu0 %v1512
        %1577 = vmatprep.subr.mxu0 0.0
        %1578 = vmatpush1.msra.mxu0 %v1514
        %1579 = vmatprep.subr.mxu0 0.0
        %1580 = vmatpush1.msra.mxu0 %v1516
        %1581 = vmatprep.subr.mxu0 0.0
        %1582 = vmatpush1.msra.mxu0 %v1518
        %1583 = vmatprep.subr.mxu0 0.0
        %1584 = vmatpush1.msra.mxu0 %v1520
        %1585 = vmatprep.subr.mxu0 0.0
        %1586 = vmatpush1.msra.mxu0 %v1522
        %1587 = vmatprep.subr.mxu0 0.0
        %1588 = vmatpush1.msra.mxu0 %v1524
        %1589 = vmatprep.subr.mxu0 0.0
        %1590 = vmatpush1.msra.mxu0 %v1526
        %1591 = vmatprep.subr.mxu0 0.0
        %1592 = vmatpush1.msra.mxu0 %v1528
        %1593 = vmatprep.subr.mxu0 0.0
        %1594 = vmatpush1.msra.mxu0 %v1530
        %1595 = vmatprep.subr.mxu0 0.0
        %1596 = vmatpush1.msra.mxu0 %v1532
        %1597 = vmatprep.subr.mxu0 0.0
        %1598 = vmatpush1.msra.mxu0 %v1534
        %1599 = vmatprep.subr.mxu0 0.0
        %1600 = vmatpush1.msra.mxu0 %v1536
        %1601 = vmatprep.subr.mxu0 0.0
        %1602 = vmatpush1.msra.mxu0 %v1538
        %1603 = vmatprep.mubr.f32.mxu0 1.0
        %1604 = vmatmul.mubr.f32.gmra.mrb[0].mxu0 1.0
        %v1605 = vpop.f32.mrb[0].mxu0
        %v1606 = vadd.f32 0.0, %v1605
        %v1607 = vpop.f32.mrb[0].mxu0
        %1608 = vdwg.mxu0
        %v1609 = vmul.f32 %v1606, 0.00390625
        %v1610 = vlog2.pop %v1609
        %v1611 = vmul.f32 %v1610, 0.6931472
        %v1612 = vstv %s1345
        %v1613 = vrcp.pop %v1612
        %s1614 = vtos %v1613
        %v1615 = vstv %s1614
        %v1616 = vmul.f32 %v1611, %v1615
        %v1617 = vmul.f32 %v1616, 1.442695
        %v1618 = vpow.pop %v1617
        %v1619 = vpack.c.bf16 %v1618, %v1618
        %v1620 = vld [vmem:[%s5] sm:$0xf]
        %v1621 = vld [vmem:[%s5 + $0x4] sm:$0xf]
        %v1622 = vld [vmem:[%s5 + $0x8] sm:$0xf]
        %v1623 = vld [vmem:[%s5 + $0xc] sm:$0xf]
        %v1624 = vld [vmem:[%s5 + $0x10] sm:$0xf]
        %v1625 = vld [vmem:[%s5 + $0x14] sm:$0xf]
        %v1626 = vld [vmem:[%s5 + $0x18] sm:$0xf]
        %v1627 = vld [vmem:[%s5 + $0x1c] sm:$0xf]
        %v1628 = vld [vmem:[%s6] sm:$0x1]
        %v1637 = vunpack.c.l.b16 %v1620
        %v1638 = vunpack.c.l.b16 %v1621
        %v1639 = vunpack.c.l.b16 %v1622
        %v1640 = vunpack.c.l.b16 %v1623
        %v1641 = vunpack.c.l.b16 %v1624
        %v1642 = vunpack.c.l.b16 %v1625
        %v1643 = vunpack.c.l.b16 %v1626
        %v1644 = vunpack.c.l.b16 %v1627
        %v1645 = vpack.c.b16 %v1638, %v1637
        %v1646 = vpack.c.b16 %v1640, %v1639
        %v1647 = vpack.c.b16 %v1642, %v1641
        %v1648 = vpack.c.b16 %v1644, %v1643
        %vm1653 = vcmask 523264
        %v1655 = vsel %vm1653, %v1619, 0
        %1657 = vmatprep.subr.bf16.mxu0 0
        %1658 = vmatpush1.bf16.msra.mxu0 %v1645
        %1659 = vmatprep.subr.bf16.mxu0 0
        %1660 = vmatpush1.bf16.msra.mxu0 %v1646
        %1661 = vmatprep.subr.bf16.mxu0 0
        %1662 = vmatpush1.bf16.msra.mxu0 %v1647
        %1663 = vmatprep.subr.bf16.mxu0 0
        %1664 = vmatpush1.bf16.msra.mxu0 %v1648
        %1665 = vmatprep.subr.bf16.mxu0 0
        %1666 = vmatpush1.bf16.msra.mxu0 0
        %1667 = vmatprep.subr.bf16.mxu0 0
        %1668 = vmatpush1.bf16.msra.mxu0 0
        %1669 = vmatprep.subr.bf16.mxu0 0
        %1670 = vmatpush1.bf16.msra.mxu0 0
        %1671 = vmatprep.subr.bf16.mxu0 0
        %1672 = vmatpush1.bf16.msra.mxu0 0
        %1673 = vmatprep.subr.bf16.mxu0 0
        %1674 = vmatpush1.bf16.msra.mxu0 0
        %1675 = vmatprep.subr.bf16.mxu0 0
        %1676 = vmatpush1.bf16.msra.mxu0 0
        %1677 = vmatprep.subr.bf16.mxu0 0
        %1678 = vmatpush1.bf16.msra.mxu0 0
        %1679 = vmatprep.subr.bf16.mxu0 0
        %1680 = vmatpush1.bf16.msra.mxu0 0
        %1681 = vmatprep.subr.bf16.mxu0 0
        %1682 = vmatpush1.bf16.msra.mxu0 0
        %1683 = vmatprep.subr.bf16.mxu0 0
        %1684 = vmatpush1.bf16.msra.mxu0 0
        %1685 = vmatprep.subr.bf16.mxu0 0
        %1686 = vmatpush1.bf16.msra.mxu0 0
        %1687 = vmatprep.subr.bf16.mxu0 0
        %1688 = vmatpush1.bf16.msra.mxu0 0
        %1689 = vmatprep.mubr.bf16.mxu0 0
        %1690 = vmatmul.mubr.bf16.gmra.mrb[0].mxu0 %v1655
        %v1691 = vpop.f32.mrb[0].mxu0
        %v1692 = vadd.f32 %v1628, %v1691
        %v1693 = vpop.f32.mrb[0].mxu0
        %v1694 = vpop.f32.mrb[0].mxu0
        %v1695 = vpop.f32.mrb[0].mxu0
        %1696 = vdwg.mxu0
        %v1697 = vmax.f32 %v1692, 0.0
        %v1698 = vpack.c.bf16 %v1697, %v1697
        %v1699 = vld [vmem:[%s7] sm:$0xf]
        %v1700 = vld [vmem:[%s7 + $0x4] sm:$0xf]
        %v1701 = vld [vmem:[%s7 + $0x8] sm:$0xf]
        %v1702 = vld [vmem:[%s7 + $0xc] sm:$0xf]
        %v1703 = vld [vmem:[%s7 + $0x10] sm:$0xf]
        %v1704 = vld [vmem:[%s7 + $0x14] sm:$0xf]
        %v1705 = vld [vmem:[%s7 + $0x18] sm:$0xf]
        %v1706 = vld [vmem:[%s7 + $0x1c] sm:$0xf]
        %v1707 = vld [vmem:[%s7 + $0x20] sm:$0xf]
        %v1708 = vld [vmem:[%s7 + $0x24] sm:$0xf]
        %v1709 = vld [vmem:[%s7 + $0x28] sm:$0xf]
        %v1710 = vld [vmem:[%s7 + $0x2c] sm:$0xf]
        %v1711 = vld [vmem:[%s7 + $0x30] sm:$0xf]
        %v1712 = vld [vmem:[%s7 + $0x34] sm:$0xf]
        %v1713 = vld [vmem:[%s7 + $0x38] sm:$0xf]
        %v1714 = vld [vmem:[%s7 + $0x3c] sm:$0xf]
        %v1715 = vld [vmem:[%s8] sm:$0x1]
        %v1732 = vunpack.c.l.b16 %v1699
        %v1733 = vunpack.c.l.b16 %v1700
        %v1734 = vunpack.c.l.b16 %v1701
        %v1735 = vunpack.c.l.b16 %v1702
        %v1736 = vunpack.c.l.b16 %v1703
        %v1737 = vunpack.c.l.b16 %v1704
        %v1738 = vunpack.c.l.b16 %v1705
        %v1739 = vunpack.c.l.b16 %v1706
        %v1740 = vunpack.c.l.b16 %v1707
        %v1741 = vunpack.c.l.b16 %v1708
        %v1742 = vunpack.c.l.b16 %v1709
        %v1743 = vunpack.c.l.b16 %v1710
        %v1744 = vunpack.c.l.b16 %v1711
        %v1745 = vunpack.c.l.b16 %v1712
        %v1746 = vunpack.c.l.b16 %v1713
        %v1747 = vunpack.c.l.b16 %v1714
        %v1748 = vpack.c.b16 %v1733, %v1732
        %v1749 = vpack.c.b16 %v1735, %v1734
        %v1750 = vpack.c.b16 %v1737, %v1736
        %v1751 = vpack.c.b16 %v1739, %v1738
        %v1752 = vpack.c.b16 %v1741, %v1740
        %v1753 = vpack.c.b16 %v1743, %v1742
        %v1754 = vpack.c.b16 %v1745, %v1744
        %v1755 = vpack.c.b16 %v1747, %v1746
        %1764 = vmatprep.subr.bf16.mxu0 0
        %1765 = vmatpush1.bf16.msra.mxu0 %v1748
        %1766 = vmatprep.subr.bf16.mxu0 0
        %1767 = vmatpush1.bf16.msra.mxu0 %v1749
        %1768 = vmatprep.subr.bf16.mxu0 0
        %1769 = vmatpush1.bf16.msra.mxu0 %v1750
        %1770 = vmatprep.subr.bf16.mxu0 0
        %1771 = vmatpush1.bf16.msra.mxu0 %v1751
        %1772 = vmatprep.subr.bf16.mxu0 0
        %1773 = vmatpush1.bf16.msra.mxu0 %v1752
        %1774 = vmatprep.subr.bf16.mxu0 0
        %1775 = vmatpush1.bf16.msra.mxu0 %v1753
        %1776 = vmatprep.subr.bf16.mxu0 0
        %1777 = vmatpush1.bf16.msra.mxu0 %v1754
        %1778 = vmatprep.subr.bf16.mxu0 0
        %1779 = vmatpush1.bf16.msra.mxu0 %v1755
        %1780 = vmatprep.subr.bf16.mxu0 0
        %1781 = vmatpush1.bf16.msra.mxu0 0
        %1782 = vmatprep.subr.bf16.mxu0 0
        %1783 = vmatpush1.bf16.msra.mxu0 0
        %1784 = vmatprep.subr.bf16.mxu0 0
        %1785 = vmatpush1.bf16.msra.mxu0 0
        %1786 = vmatprep.subr.bf16.mxu0 0
        %1787 = vmatpush1.bf16.msra.mxu0 0
        %1788 = vmatprep.subr.bf16.mxu0 0
        %1789 = vmatpush1.bf16.msra.mxu0 0
        %1790 = vmatprep.subr.bf16.mxu0 0
        %1791 = vmatpush1.bf16.msra.mxu0 0
        %1792 = vmatprep.subr.bf16.mxu0 0
        %1793 = vmatpush1.bf16.msra.mxu0 0
        %1794 = vmatprep.subr.bf16.mxu0 0
        %1795 = vmatpush1.bf16.msra.mxu0 0
        %1796 = vmatprep.mubr.bf16.mxu0 0
        %1797 = vmatmul.mubr.bf16.gmra.mrb[0].mxu0 %v1698
        %v1798 = vpop.f32.mrb[0].mxu0
        %v1799 = vadd.f32 %v1715, %v1798
        %v1800 = vpop.f32.mrb[0].mxu0
        %v1801 = vpop.f32.mrb[0].mxu0
        %v1802 = vpop.f32.mrb[0].mxu0
        %1803 = vdwg.mxu0
        %1804 = vst [vmem:[%s352] sm:$0x1] %v1799
        %s1805 = sand.u32 %s248, 1
        %s1806 = scalar_lea.sflag [#allocation4], %s1805
        %s1807 = sand.u32 %s248, 1
        %s1808 = scalar_lea.vmem [#allocation3], %s1807
        // Predicated region
        $region61: #{efficinet_net_fn_forward.1} parent=59 // pred_check
          %p1809 = pneg %p258
        $region62: #{efficinet_net_fn_forward.1} parent=59 // pred_check_branch
          %1811 = sbr.rel (%p1809) target = $region64
        $region63: #{efficinet_net_fn_forward.1} parent=59 // pred_region
          %s1813 = ssub.s32 16, 16
          %1814 = vsyncadd %s1806, %s1813
          %s1815 = smul.addr %s25, 16
          %s1816 = scalar_lea.hbm %s10, %s1815
          %s1818 = sshll.u32 %s1808, 4
          %s1819 = int_to_ptr.vmem [resolvable:$true] %s1818
          %1821 = dma.vmem_to_hbm [thread:$0]  %s1819, 16, %s1816, %s1806
        $region64: #{efficinet_net_fn_forward.1} parent=59 // pred_fallthru
          _
      $region60: #{efficinet_net_fn_forward.1} parent=5 // pred_fallthru
        _
      %p1822 = scmp.le.s32.totalorder 2, %s20
      // Predicated region
      $region65: #{efficinet_net_fn_forward.1} parent=5 // pred_check
        %p1823 = pneg %p1822
      $region66: #{efficinet_net_fn_forward.1} parent=5 // pred_check_branch
        %1825 = sbr.rel (%p1823) target = $region68
      $region67: #{efficinet_net_fn_forward.1} parent=5 // pred_region
        %s1826 = ssub.s32 %s20, 2
        // Predicated region
        $region69: #{efficinet_net_fn_forward.1} parent=67 // pred_check
          %p1827 = pneg %p264
        $region70: #{efficinet_net_fn_forward.1} parent=67 // pred_check_branch
          %1829 = sbr.rel (%p1827) target = $region72
        $region71: #{efficinet_net_fn_forward.1} parent=67 // pred_region
          %s1830 = sand.u32 %s249, 1
          %s1831 = scalar_lea.sflag [#allocation4], %s1830
          %s1832 = sand.u32 %s249, 1
          %s1833 = scalar_lea.vmem [#allocation3], %s1832
          %1834 = dma.done %s1831, 16
        $region72: #{efficinet_net_fn_forward.1} parent=67 // pred_fallthru
          _
      $region68: #{efficinet_net_fn_forward.1} parent=5 // pred_fallthru
        _
    $region6: #{efficinet_net_fn_forward.1} parent=1 // loop_footer
      %s24 = sadd.s32 1, %s20
    $region7: #{efficinet_net_fn_forward.1} parent=1 // loop_footer_branch
      %19 = sbr.rel target = $region3
    $region8: #{efficinet_net_fn_forward.1} parent=1 // loop_exit
      _
    %1835 = vsyncpa [#allocation4], 1
    %s1836 = scalar_lea.sflag [#allocation4], 1
    %1837 = vsyncpa %s1836, 1

</llo_original>
